<compile_context>
chip_gen: v7x
topology: tpu7x:2x2x1
jax: 0.10.0
libtpu: 0.0.40
codegen_flags: <defaults>
</compile_context>

<pallas_src>
import functools

import jax
import jax.numpy as jnp
from jax.experimental import pallas as pl
from jax.experimental.pallas import tpu as pltpu


# ---------------------------------------------------------------------------
# Pallas kernels
# ---------------------------------------------------------------------------
def _xform_kernel(x_ref, w_ref, out_ref):
    """Row-tiled feature transform: out_tile = x_tile @ W (bf16 in, f32 acc, bf16 out)."""
    out_ref[...] = jnp.dot(x_ref[...], w_ref[...],
                           preferred_element_type=jnp.float32).astype(out_ref.dtype)


def _prop_kernel(p_ref, xw_ref, msum_ref, b_ref, out_ref, acc_ref, *,
                 activation, valid_cols):
    """Row+K tiled fused propagation for one layer:
         acc += P[i_tile, k_tile] @ xw[k_tile]          (bf16 operands, f32 acc)
       finalize:  z = acc + msum_tile * b   then relu (layer 1)
                  or column-masked log_softmax (layer 2)."""
    k = pl.program_id(1)

    @pl.when(k == 0)
    def _():
        acc_ref[...] = jnp.zeros_like(acc_ref)

    acc_ref[...] += jnp.dot(p_ref[...], xw_ref[...],
                            preferred_element_type=jnp.float32)

    @pl.when(k == pl.num_programs(1) - 1)
    def _():
        z = acc_ref[...] + msum_ref[...] * b_ref[...]      # folded M @ bias
        if activation == "relu":
            out_ref[...] = jnp.maximum(z, 0.0).astype(out_ref.dtype)
        else:  # log_softmax over dim=1, masking lane-padding columns
            col = jax.lax.broadcasted_iota(jnp.int32, z.shape, 1)
            zm = jnp.where(col < valid_cols, z, -1e30)
            zmax = jnp.max(zm, axis=1, keepdims=True)
            zs = zm - zmax
            lse = jnp.log(jnp.sum(jnp.exp(zs), axis=1, keepdims=True))
            out_ref[...] = (zs - lse).astype(out_ref.dtype)


def _xform(x_bf, w_bf, *, tm):
    n_p, f_p = x_bf.shape
    h_p = w_bf.shape[1]
    return pl.pallas_call(
        _xform_kernel,
        out_shape=jax.ShapeDtypeStruct((n_p, h_p), jnp.bfloat16),
        grid=(n_p // tm,),
        in_specs=[pl.BlockSpec((tm, f_p), lambda i: (i, 0)),
                  pl.BlockSpec((f_p, h_p), lambda i: (0, 0))],
        out_specs=pl.BlockSpec((tm, h_p), lambda i: (i, 0)),
        compiler_params=pltpu.CompilerParams(
            dimension_semantics=("parallel",)),
    )(x_bf, w_bf)


def _propagate(p_bf, xw_bf, msum, b, *, tm, tk, activation, valid_cols, out_dtype):
    n_p = p_bf.shape[0]
    h_p = xw_bf.shape[1]
    kernel = functools.partial(_prop_kernel,
                               activation=activation, valid_cols=valid_cols)
    return pl.pallas_call(
        kernel,
        out_shape=jax.ShapeDtypeStruct((n_p, h_p), out_dtype),
        grid=(n_p // tm, n_p // tk),
        in_specs=[
            pl.BlockSpec((tm, tk), lambda i, k: (i, k)),    # P block, bf16 stream
            pl.BlockSpec((tk, h_p), lambda i, k: (k, 0)),   # xw block, bf16 stream
            pl.BlockSpec((tm, 1), lambda i, k: (i, 0)),     # msum rows
            pl.BlockSpec((1, h_p), lambda i, k: (0, 0)),    # bias
        ],
        out_specs=pl.BlockSpec((tm, h_p), lambda i, k: (i, 0)),
        scratch_shapes=[pltpu.VMEM((tm, h_p), jnp.float32)],
        compiler_params=pltpu.CompilerParams(
            dimension_semantics=("parallel", "arbitrary")),  # rows over TCs, K serial
    )(p_bf, xw_bf, msum, b)


# ---------------------------------------------------------------------------
# JAX glue: static-graph precompute (done ONCE, outside the forward)
# ---------------------------------------------------------------------------
def build_ahat(edge_index, num_nodes):
    """Dense D^{-1/2}(A+I)D^{-1/2}, matching torch_geometric GCNConv gcn_norm."""
    row, col = edge_index  # row = source, col = target
    loops = jnp.arange(num_nodes, dtype=row.dtype)
    row = jnp.concatenate([row, loops])
    col = jnp.concatenate([col, loops])
    w = jnp.ones(row.shape[0], dtype=jnp.float32)
    deg = jnp.zeros((num_nodes,), jnp.float32).at[col].add(w)
    dis = jnp.where(deg > 0, jax.lax.rsqrt(deg), 0.0)
    norm = dis[row] * w * dis[col]
    # out[col] += norm * x[row]  ->  Ahat[col, row] += norm
    return jnp.zeros((num_nodes, num_nodes), jnp.float32).at[col, row].add(norm)


def precompute_propagation(edge_index, repulsive_edge_index, num_nodes):
    """Returns (P, msum) with P = M @ Ahat and msum = M @ 1, in closed form.

    M = I - R with R[i, rep_col[i]] = deg^{-1/2}[rep_row[i]] * deg^{-1/2}[rep_col[i]];
    since each row of R has a single nonzero:
        P    = Ahat - norm_rep[:, None] * Ahat[rep_col, :]     (O(N^2) gather+scale)
        msum = 1 - norm_rep
    Matches `x - norm[:, None] * x[col]`, which requires E_rep == num_nodes.
    """
    row, col = repulsive_edge_index
    assert row.shape[0] == num_nodes, "repulsive_edge_index must have N edges"
    ahat = build_ahat(edge_index, num_nodes)
    deg = jnp.zeros((num_nodes,), jnp.float32).at[col].add(
        jnp.ones(col.shape[0], jnp.float32))
    dis = jnp.where(deg > 0, jax.lax.rsqrt(deg), 0.0)   # inf -> 0 via where
    norm = dis[row] * dis[col]                          # [N]
    p = ahat - norm[:, None] * ahat[col, :]
    msum = (1.0 - norm)[:, None]
    return p.astype(jnp.bfloat16), msum.astype(jnp.float32)


def _round_up(v, m):
    return ((v + m - 1) // m) * m


def _pad2(a, rows, cols):
    return jnp.pad(a, ((0, rows - a.shape[0]), (0, cols - a.shape[1])))


@functools.partial(jax.jit, static_argnames=("tm", "max_tk"))
def gcn_forward_pallas(x, p_bf16, msum, w1, b1, w2, b2, *, tm=128, max_tk=512):
    n, f = x.shape
    h = w1.shape[1]
    c = w2.shape[1]
    n_p = _round_up(n, tm)
    f_p = _round_up(f, 128)
    h_p = _round_up(h, 128)
    c_p = _round_up(c, 128)
    tk = max_tk                          # largest power-of-two <= max_tk dividing n_p
    while n_p % tk:
        tk //= 2

    p_pad = _pad2(p_bf16, n_p, n_p)                       # bf16 stream, f32 accumulate
    msum_pad = _pad2(msum, n_p, 1)
    x_pad = _pad2(x, n_p, f_p).astype(jnp.bfloat16)
    w1_pad = _pad2(w1, f_p, h_p).astype(jnp.bfloat16)
    b1_pad = _pad2(b1, 1, h_p).astype(jnp.float32)
    w2_pad = _pad2(w2, h_p, c_p).astype(jnp.bfloat16)
    b2_pad = _pad2(b2, 1, c_p).astype(jnp.float32)

    # ---- layer 1 ----
    xw1 = _xform(x_pad, w1_pad, tm=tm)
    h1 = _propagate(p_pad, xw1, msum_pad, b1_pad, tm=tm, tk=tk,
                    activation="relu", valid_cols=h_p, out_dtype=jnp.bfloat16)
    # F.dropout(x, training=self.training): eval mode -> identity.
    # TODO(synk): training-mode dropout (pltpu.prng_seed + prng_random_bits) not emitted.

    # ---- layer 2 ----
    xw2 = _xform(h1, w2_pad, tm=tm)
    out = _propagate(p_pad, xw2, msum_pad, b2_pad, tm=tm, tk=tk,
                     activation="log_softmax", valid_cols=c, out_dtype=jnp.float32)
    return out[:n, :c]


def glorot(key, shape):
    fan_in, fan_out = shape
    lim = jnp.sqrt(6.0 / (fan_in + fan_out))
    return jax.random.uniform(key, shape, jnp.float32, -lim, lim)


# ---------------------------------------------------------------------------
if __name__ == "__main__":
    key = jax.random.PRNGKey(0)
    N = 200             # nodes (deliberately not 128-aligned; wrapper pads to 256)
    F_IN = 32           # dataset.num_features
    HID = 16            # conv1 out_channels
    C = 4               # dataset.num_classes
    E = 800             # attractive edges

    k_x, k_e1, k_e2, k_rep, k_w1, k_w2 = jax.random.split(key, 6)

    # node features
    x = jax.random.normal(k_x, (N, F_IN), jnp.float32)

    # attractive graph edges (source, target)
    src = jax.random.randint(k_e1, (E,), 0, N)
    dst = jax.random.randint(k_e2, (E,), 0, N)
    edge_index = jnp.stack([src, dst])

    # repulsive edges: exactly N of them (required by the broadcast in the module)
    rep_row = jnp.arange(N, dtype=jnp.int32)
    rep_col = jax.random.permutation(k_rep, N).astype(jnp.int32)
    repulsive_edge_index = jnp.stack([rep_row, rep_col])

    # parameters (GCNConv: weight glorot stored pre-transposed [in, out], bias zeros)
    w1 = glorot(k_w1, (F_IN, HID))
    b1 = jnp.zeros((1, HID), jnp.float32)
    w2 = glorot(k_w2, (HID, C))
    b2 = jnp.zeros((1, C), jnp.float32)

    # static-graph precompute: built once, reused by every forward call
    p_bf16, msum = precompute_propagation(edge_index, repulsive_edge_index, N)

    out = gcn_forward_pallas(x, p_bf16, msum, w1, b1, w2, b2)
    out = jax.block_until_ready(out)

    # pure-JAX reference mirroring the kernel arithmetic (bf16 operands, f32
    # accumulation) so the comparison stays tight.
    def layer_ref(xin, w, b):
        xw = jnp.dot(xin.astype(jnp.bfloat16), w.astype(jnp.bfloat16),
                     preferred_element_type=jnp.float32).astype(jnp.bfloat16)
        return jnp.dot(p_bf16, xw, preferred_element_type=jnp.float32) + msum * b

    h_ref = jnp.maximum(layer_ref(x, w1, b1), 0.0)
    z_ref = layer_ref(h_ref, w2, b2)
    ref = jax.nn.log_softmax(z_ref, axis=1)

    assert out.shape == (N, C)
    max_err = float(jnp.max(jnp.abs(out - ref)))
    assert jnp.allclose(out, ref, atol=3e-2, rtol=3e-2), f"max_err={max_err}"

    print("KERNEL_OK")
</pallas_src>

<mosaic_0001>
module attributes {stable_mosaic.version = 11 : i64} {
  func.func @_xform_kernel(%arg0: i32, %arg1: memref<128x128xbf16, #tpu.memory_space<vmem>>, %arg2: memref<128x128xbf16, #tpu.memory_space<vmem>>, %arg3: memref<128x128xbf16, #tpu.memory_space<vmem>>) attributes {dimension_semantics = [#tpu.dimension_semantics<parallel>], iteration_bounds = array<i64: 2>, scalar_prefetch = 0 : i64, scratch_operands = 0 : i64, tpu.core_type = #tpu.core_type<tc>, window_params = [{transform_indices = @transform_0, window_bounds = array<i64: 128, 128>}, {pipeline_mode = #tpu.pipeline_mode<synchronous>, transform_indices = @transform_1, window_bounds = array<i64: 128, 128>}, {transform_indices = @transform_2, window_bounds = array<i64: 128, 128>}]} {
    %c0 = arith.constant 0 : index
    %c0_0 = arith.constant 0 : index
    %0 = vector.load %arg1[%c0, %c0_0] : memref<128x128xbf16, #tpu.memory_space<vmem>>, vector<128x128xbf16>
    %c0_1 = arith.constant 0 : index
    %c0_2 = arith.constant 0 : index
    %1 = vector.load %arg2[%c0_1, %c0_2] : memref<128x128xbf16, #tpu.memory_space<vmem>>, vector<128x128xbf16>
    %cst = arith.constant dense<0.000000e+00> : vector<128x128xf32>
    %2 = tpu.matmul %0, %1, %cst {dimension_numbers = #tpu.dot_dimension_numbers<[1], [0], [0], [1], [0, 0, 1, 1], [], []>} : vector<128x128xbf16>, vector<128x128xbf16>, vector<128x128xf32> -> vector<128x128xf32>
    %3 = arith.truncf %2 : vector<128x128xf32> to vector<128x128xbf16>
    %c0_3 = arith.constant 0 : index
    %c0_4 = arith.constant 0 : index
    %4 = vector.load %arg3[%c0_3, %c0_4] : memref<128x128xbf16, #tpu.memory_space<vmem>>, vector<128x128xbf16>
    tpu.vector_store %arg3[%c0_3, %c0_4], %3 {strides = array<i32>} : memref<128x128xbf16, #tpu.memory_space<vmem>>, vector<128x128xbf16>,
    return
  }
  func.func @transform_0(%arg0: i32) -> (i32, i32) {
    %c0_i32 = arith.constant 0 : i32
    %c0_i32_0 = arith.constant 0 : i32
    return %arg0, %c0_i32 : i32, i32
  }
  func.func @transform_1(%arg0: i32) -> (i32, i32) {
    %c0_i32 = arith.constant 0 : i32
    %c0_i32_0 = arith.constant 0 : i32
    %c0_i32_1 = arith.constant 0 : i32
    return %c0_i32, %c0_i32_0 : i32, i32
  }
  func.func @transform_2(%arg0: i32) -> (i32, i32) {
    %c0_i32 = arith.constant 0 : i32
    %c0_i32_0 = arith.constant 0 : i32
    return %arg0, %c0_i32 : i32, i32
  }
}

module attributes {stable_mosaic.version = 11 : i64} {
  func.func @_prop_kernel(%arg0: i32, %arg1: i32, %arg2: memref<128x256xbf16, #tpu.memory_space<vmem>>, %arg3: memref<256x128xbf16, #tpu.memory_space<vmem>>, %arg4: memref<128x1xf32, #tpu.memory_space<vmem>>, %arg5: memref<1x128xf32, #tpu.memory_space<vmem>>, %arg6: memref<128x128xbf16, #tpu.memory_space<vmem>>, %arg7: memref<128x128xf32, #tpu.memory_space<vmem>>) attributes {dimension_semantics = [#tpu.dimension_semantics<parallel>, #tpu.dimension_semantics<arbitrary>], iteration_bounds = array<i64: 2, 1>, scalar_prefetch = 0 : i64, scratch_operands = 1 : i64, tpu.core_type = #tpu.core_type<tc>, window_params = [{transform_indices = @transform_0, window_bounds = array<i64: 128, 256>}, {transform_indices = @transform_1, window_bounds = array<i64: 256, 128>}, {transform_indices = @transform_2, window_bounds = array<i64: 128, 1>}, {pipeline_mode = #tpu.pipeline_mode<synchronous>, transform_indices = @transform_3, window_bounds = array<i64: 1, 128>}, {transform_indices = @transform_4, window_bounds = array<i64: 128, 128>}]} {
    %c0_i32 = arith.constant 0 : i32
    %0 = arith.cmpi eq, %arg1, %c0_i32 : i32
    %1 = arith.extui %0 : i1 to i32
    %c0_i32_0 = arith.constant 0 : i32
    %2 = arith.cmpi ne, %1, %c0_i32_0 : i32
    scf.if %2 {
      %cst_10 = arith.constant 0.000000e+00 : f32
      %12 = vector.broadcast %cst_10 : f32 to vector<128x128xf32>
      %c0_11 = arith.constant 0 : index
      %c0_12 = arith.constant 0 : index
      %13 = vector.load %arg7[%c0_11, %c0_12] : memref<128x128xf32, #tpu.memory_space<vmem>>, vector<128x128xf32>
      tpu.vector_store %arg7[%c0_11, %c0_12], %12 {strides = array<i32>} : memref<128x128xf32, #tpu.memory_space<vmem>>, vector<128x128xf32>,
    } else {
    }
    %c0 = arith.constant 0 : index
    %c0_1 = arith.constant 0 : index
    %3 = vector.load %arg7[%c0, %c0_1] : memref<128x128xf32, #tpu.memory_space<vmem>>, vector<128x128xf32>
    %c0_2 = arith.constant 0 : index
    %c0_3 = arith.constant 0 : index
    %4 = vector.load %arg2[%c0_2, %c0_3] : memref<128x256xbf16, #tpu.memory_space<vmem>>, vector<128x256xbf16>
    %c0_4 = arith.constant 0 : index
    %c0_5 = arith.constant 0 : index
    %5 = vector.load %arg3[%c0_4, %c0_5] : memref<256x128xbf16, #tpu.memory_space<vmem>>, vector<256x128xbf16>
    %cst = arith.constant dense<0.000000e+00> : vector<128x128xf32>
    %6 = tpu.matmul %4, %5, %cst {dimension_numbers = #tpu.dot_dimension_numbers<[1], [0], [0], [1], [0, 0, 1, 1], [], []>} : vector<128x256xbf16>, vector<256x128xbf16>, vector<128x128xf32> -> vector<128x128xf32>
    %7 = arith.addf %3, %6 : vector<128x128xf32>
    %c0_6 = arith.constant 0 : index
    %c0_7 = arith.constant 0 : index
    %8 = vector.load %arg7[%c0_6, %c0_7] : memref<128x128xf32, #tpu.memory_space<vmem>>, vector<128x128xf32>
    tpu.vector_store %arg7[%c0_6, %c0_7], %7 {strides = array<i32>} : memref<128x128xf32, #tpu.memory_space<vmem>>, vector<128x128xf32>,
    %c0_i32_8 = arith.constant 0 : i32
    %9 = arith.cmpi eq, %arg1, %c0_i32_8 : i32
    %10 = arith.extui %9 : i1 to i32
    %c0_i32_9 = arith.constant 0 : i32
    %11 = arith.cmpi ne, %10, %c0_i32_9 : i32
    scf.if %11 {
      %c0_10 = arith.constant 0 : index
      %c0_11 = arith.constant 0 : index
      %12 = vector.load %arg7[%c0_10, %c0_11] : memref<128x128xf32, #tpu.memory_space<vmem>>, vector<128x128xf32>
      %c0_12 = arith.constant 0 : index
      %c0_13 = arith.constant 0 : index
      %13 = vector.load %arg4[%c0_12, %c0_13] : memref<128x1xf32, #tpu.memory_space<vmem>>, vector<128x1xf32>
      %c0_14 = arith.constant 0 : index
      %c0_15 = arith.constant 0 : index
      %14 = vector.load %arg5[%c0_14, %c0_15] : memref<1x128xf32, #tpu.memory_space<vmem>>, vector<1x128xf32>
      %15 = vector.broadcast %13 : vector<128x1xf32> to vector<128x128xf32>
      %16 = vector.broadcast %14 : vector<1x128xf32> to vector<128x128xf32>
      %17 = arith.mulf %15, %16 : vector<128x128xf32>
      %18 = arith.addf %12, %17 : vector<128x128xf32>
      %cst_16 = arith.constant 0.000000e+00 : f32
      %19 = vector.broadcast %cst_16 : f32 to vector<128x128xf32>
      %20 = arith.maximumf %18, %19 : vector<128x128xf32>
      %21 = arith.truncf %20 : vector<128x128xf32> to vector<128x128xbf16>
      %c0_17 = arith.constant 0 : index
      %c0_18 = arith.constant 0 : index
      %22 = vector.load %arg6[%c0_17, %c0_18] : memref<128x128xbf16, #tpu.memory_space<vmem>>, vector<128x128xbf16>
      tpu.vector_store %arg6[%c0_17, %c0_18], %21 {strides = array<i32>} : memref<128x128xbf16, #tpu.memory_space<vmem>>, vector<128x128xbf16>,
    } else {
    }
    return
  }
  func.func @transform_0(%arg0: i32, %arg1: i32) -> (i32, i32) {
    %c0_i32 = arith.constant 0 : i32
    return %arg0, %arg1 : i32, i32
  }
  func.func @transform_1(%arg0: i32, %arg1: i32) -> (i32, i32) {
    %c0_i32 = arith.constant 0 : i32
    %c0_i32_0 = arith.constant 0 : i32
    return %arg1, %c0_i32 : i32, i32
  }
  func.func @transform_2(%arg0: i32, %arg1: i32) -> (i32, i32) {
    %c0_i32 = arith.constant 0 : i32
    %c0_i32_0 = arith.constant 0 : i32
    return %arg0, %c0_i32 : i32, i32
  }
  func.func @transform_3(%arg0: i32, %arg1: i32) -> (i32, i32) {
    %c0_i32 = arith.constant 0 : i32
    %c0_i32_0 = arith.constant 0 : i32
    %c0_i32_1 = arith.constant 0 : i32
    return %c0_i32, %c0_i32_0 : i32, i32
  }
  func.func @transform_4(%arg0: i32, %arg1: i32) -> (i32, i32) {
    %c0_i32 = arith.constant 0 : i32
    %c0_i32_0 = arith.constant 0 : i32
    return %arg0, %c0_i32 : i32, i32
  }
}

module attributes {stable_mosaic.version = 11 : i64} {
  func.func @_prop_kernel(%arg0: i32, %arg1: i32, %arg2: memref<128x256xbf16, #tpu.memory_space<vmem>>, %arg3: memref<256x128xbf16, #tpu.memory_space<vmem>>, %arg4: memref<128x1xf32, #tpu.memory_space<vmem>>, %arg5: memref<1x128xf32, #tpu.memory_space<vmem>>, %arg6: memref<128x128xf32, #tpu.memory_space<vmem>>, %arg7: memref<128x128xf32, #tpu.memory_space<vmem>>) attributes {dimension_semantics = [#tpu.dimension_semantics<parallel>, #tpu.dimension_semantics<arbitrary>], iteration_bounds = array<i64: 2, 1>, scalar_prefetch = 0 : i64, scratch_operands = 1 : i64, tpu.core_type = #tpu.core_type<tc>, window_params = [{transform_indices = @transform_0, window_bounds = array<i64: 128, 256>}, {transform_indices = @transform_1, window_bounds = array<i64: 256, 128>}, {transform_indices = @transform_2, window_bounds = array<i64: 128, 1>}, {pipeline_mode = #tpu.pipeline_mode<synchronous>, transform_indices = @transform_3, window_bounds = array<i64: 1, 128>}, {transform_indices = @transform_4, window_bounds = array<i64: 128, 128>}]} {
    %c0_i32 = arith.constant 0 : i32
    %0 = arith.cmpi eq, %arg1, %c0_i32 : i32
    %1 = arith.extui %0 : i1 to i32
    %c0_i32_0 = arith.constant 0 : i32
    %2 = arith.cmpi ne, %1, %c0_i32_0 : i32
    scf.if %2 {
      %cst_10 = arith.constant 0.000000e+00 : f32
      %12 = vector.broadcast %cst_10 : f32 to vector<128x128xf32>
      %c0_11 = arith.constant 0 : index
      %c0_12 = arith.constant 0 : index
      %13 = vector.load %arg7[%c0_11, %c0_12] : memref<128x128xf32, #tpu.memory_space<vmem>>, vector<128x128xf32>
      tpu.vector_store %arg7[%c0_11, %c0_12], %12 {strides = array<i32>} : memref<128x128xf32, #tpu.memory_space<vmem>>, vector<128x128xf32>,
    } else {
    }
    %c0 = arith.constant 0 : index
    %c0_1 = arith.constant 0 : index
    %3 = vector.load %arg7[%c0, %c0_1] : memref<128x128xf32, #tpu.memory_space<vmem>>, vector<128x128xf32>
    %c0_2 = arith.constant 0 : index
    %c0_3 = arith.constant 0 : index
    %4 = vector.load %arg2[%c0_2, %c0_3] : memref<128x256xbf16, #tpu.memory_space<vmem>>, vector<128x256xbf16>
    %c0_4 = arith.constant 0 : index
    %c0_5 = arith.constant 0 : index
    %5 = vector.load %arg3[%c0_4, %c0_5] : memref<256x128xbf16, #tpu.memory_space<vmem>>, vector<256x128xbf16>
    %cst = arith.constant dense<0.000000e+00> : vector<128x128xf32>
    %6 = tpu.matmul %4, %5, %cst {dimension_numbers = #tpu.dot_dimension_numbers<[1], [0], [0], [1], [0, 0, 1, 1], [], []>} : vector<128x256xbf16>, vector<256x128xbf16>, vector<128x128xf32> -> vector<128x128xf32>
    %7 = arith.addf %3, %6 : vector<128x128xf32>
    %c0_6 = arith.constant 0 : index
    %c0_7 = arith.constant 0 : index
    %8 = vector.load %arg7[%c0_6, %c0_7] : memref<128x128xf32, #tpu.memory_space<vmem>>, vector<128x128xf32>
    tpu.vector_store %arg7[%c0_6, %c0_7], %7 {strides = array<i32>} : memref<128x128xf32, #tpu.memory_space<vmem>>, vector<128x128xf32>,
    %c0_i32_8 = arith.constant 0 : i32
    %9 = arith.cmpi eq, %arg1, %c0_i32_8 : i32
    %10 = arith.extui %9 : i1 to i32
    %c0_i32_9 = arith.constant 0 : i32
    %11 = arith.cmpi ne, %10, %c0_i32_9 : i32
    scf.if %11 {
      %c0_10 = arith.constant 0 : index
      %c0_11 = arith.constant 0 : index
      %12 = vector.load %arg7[%c0_10, %c0_11] : memref<128x128xf32, #tpu.memory_space<vmem>>, vector<128x128xf32>
      %c0_12 = arith.constant 0 : index
      %c0_13 = arith.constant 0 : index
      %13 = vector.load %arg4[%c0_12, %c0_13] : memref<128x1xf32, #tpu.memory_space<vmem>>, vector<128x1xf32>
      %c0_14 = arith.constant 0 : index
      %c0_15 = arith.constant 0 : index
      %14 = vector.load %arg5[%c0_14, %c0_15] : memref<1x128xf32, #tpu.memory_space<vmem>>, vector<1x128xf32>
      %15 = vector.broadcast %13 : vector<128x1xf32> to vector<128x128xf32>
      %16 = vector.broadcast %14 : vector<1x128xf32> to vector<128x128xf32>
      %17 = arith.mulf %15, %16 : vector<128x128xf32>
      %18 = arith.addf %12, %17 : vector<128x128xf32>
      %19 = tpu.iota {dimensions = array<i32: 1>} : vector<128x128xi32>
      %c4_i32 = arith.constant 4 : i32
      %20 = vector.broadcast %c4_i32 : i32 to vector<128x128xi32>
      %21 = arith.cmpi slt, %19, %20 : vector<128x128xi32>
      %cst_16 = arith.constant -1.000000e+30 : f32
      %22 = vector.broadcast %cst_16 : f32 to vector<128x128xf32>
      %23 = arith.select %21, %18, %22 : vector<128x128xi1>, vector<128x128xf32>
      %cst_17 = arith.constant dense<0xFF800000> : vector<128xf32>
      %24 = vector.multi_reduction <maximumf>, %23, %cst_17 [1] : vector<128x128xf32> to vector<128xf32>
      %25 = vector.shape_cast %24 : vector<128xf32> to vector<128x1xf32>
      %26 = vector.broadcast %25 : vector<128x1xf32> to vector<128x128xf32>
      %27 = arith.subf %23, %26 : vector<128x128xf32>
      %28 = math.exp %27 : vector<128x128xf32>
      %cst_18 = arith.constant dense<0.000000e+00> : vector<128xf32>
      %29 = vector.multi_reduction <add>, %28, %cst_18 [1] : vector<128x128xf32> to vector<128xf32>
      %30 = vector.shape_cast %29 : vector<128xf32> to vector<128x1xf32>
      %31 = math.log %30 : vector<128x1xf32>
      %32 = vector.broadcast %31 : vector<128x1xf32> to vector<128x128xf32>
      %33 = arith.subf %27, %32 : vector<128x128xf32>
      %c0_19 = arith.constant 0 : index
      %c0_20 = arith.constant 0 : index
      %34 = vector.load %arg6[%c0_19, %c0_20] : memref<128x128xf32, #tpu.memory_space<vmem>>, vector<128x128xf32>
      tpu.vector_store %arg6[%c0_19, %c0_20], %33 {strides = array<i32>} : memref<128x128xf32, #tpu.memory_space<vmem>>, vector<128x128xf32>,
    } else {
    }
    return
  }
  func.func @transform_0(%arg0: i32, %arg1: i32) -> (i32, i32) {
    %c0_i32 = arith.constant 0 : i32
    return %arg0, %arg1 : i32, i32
  }
  func.func @transform_1(%arg0: i32, %arg1: i32) -> (i32, i32) {
    %c0_i32 = arith.constant 0 : i32
    %c0_i32_0 = arith.constant 0 : i32
    return %arg1, %c0_i32 : i32, i32
  }
  func.func @transform_2(%arg0: i32, %arg1: i32) -> (i32, i32) {
    %c0_i32 = arith.constant 0 : i32
    %c0_i32_0 = arith.constant 0 : i32
    return %arg0, %c0_i32 : i32, i32
  }
  func.func @transform_3(%arg0: i32, %arg1: i32) -> (i32, i32) {
    %c0_i32 = arith.constant 0 : i32
    %c0_i32_0 = arith.constant 0 : i32
    %c0_i32_1 = arith.constant 0 : i32
    return %c0_i32, %c0_i32_0 : i32, i32
  }
  func.func @transform_4(%arg0: i32, %arg1: i32) -> (i32, i32) {
    %c0_i32 = arith.constant 0 : i32
    %c0_i32_0 = arith.constant 0 : i32
    return %arg0, %c0_i32 : i32, i32
  }
}

</mosaic_0001>

<llo_original>
// kernel: gcn_forward_pallas.4
$region0: #{gcn_forward_pallas.4}
  #allocation0 [shape = 'u32[]', space=smem, size = 0x4, offset = 0x4, fixed_abs, tag = 'smem constant byte address 0x4 - core index']
  #allocation1 [shape = 'u32[144,128]{1,0:T(1,128)}', space=vmem, size = 0x12000, scoped, tag = 'internal scratch']
  %s0 = inlined_call_operand.vmem [shape: bf16[256,128], index: 0, kind: input, shape index: {}]
  %s1 = inlined_call_operand.vmem [shape: bf16[128,128], index: 1, kind: input, shape index: {}]
  %s2 = inlined_call_operand.vmem [shape: bf16[256,128], index: 2, kind: output, shape index: {}]
  %s3 = sld [smem:[#allocation0]]
  $region41: #{gcn_forward_pallas.4} parent=0
    _
  %s5 = ssub.s32 1, %s3
  %s6 = scalar_select 0, %s5, %s3
  loop: start=0, step=1, limit=4
  $region2: #{gcn_forward_pallas.4} parent=0 // loop_pre_header
    _
  $region3: #{gcn_forward_pallas.4} parent=0 // loop_header
    %s8 = sphi 0, %s12
    %p9 = scmp.ge.s32.totalorder %s8, 4
    %s18 = sphi 0, %s20
    %s21 = sphi 0, %s18
    %s22 = sphi 0, %s21
    %s38 = sphi 0, %s22
    %s42 = sphi 0, %s42
    %s44 = sphi 0, %s42
    %s45 = sphi 0, %s44
    %s59 = sphi 0, %s45
    %s65 = sphi 0, %s67
    %s68 = sphi 0, %s65
    %s69 = sphi 0, %s68
    %s85 = sphi 0, %s69
  $region4: #{gcn_forward_pallas.4} parent=0 // loop_header_branch
    %11 = sbr.rel (%p9) target = $region8
  $region5: #{gcn_forward_pallas.4} parent=0 // loop_body
    %s13 = ssub.s32 %s8, 1
    %s14 = ssub.s32 %s8, 2
    %s15 = sadd.s32 %s8, 1
    %s16 = ssub.s32 %s8, %s15
    %p17 = scmp.eq.s32.totalorder %s16, 0
    %s19 = sadd.s32 %s18, 1
    %s20 = scalar_select %p17, %s18, %s19
    %p23 = pneg %p17
    %p24 = scmp.eq.s32.totalorder %s8, 1
    %p25 = por %p23, %p24
    %p26 = scmp.ne.s32.totalorder %s18, %s21
    %p27 = scmp.eq.s32.totalorder %s8, 0
    %p28 = por %p26, %p27
    %p29 = scmp.ne.s32.totalorder %s18, %s21
    %p30 = scmp.eq.s32.totalorder %s13, 1
    %p31 = por %p29, %p30
    %p32 = scmp.ne.s32.totalorder %s21, %s22
    %p33 = scmp.eq.s32.totalorder %s13, 0
    %p34 = por %p32, %p33
    %p35 = scmp.ne.s32.totalorder %s21, %s22
    %p36 = scmp.eq.s32.totalorder %s14, 1
    %p37 = por %p35, %p36
    %p39 = scmp.ne.s32.totalorder %s22, %s38
    %p40 = scmp.eq.s32.totalorder %s14, 0
    %p41 = por %p39, %p40
    %s43 = sadd.s32 %s42, 1
    %p46 = scmp.eq.s32.totalorder %s8, 1
    %p47 = scmp.ne.s32.totalorder %s42, %s44
    %p48 = scmp.eq.s32.totalorder %s8, 0
    %p49 = por %p47, %p48
    %p50 = scmp.ne.s32.totalorder %s42, %s44
    %p51 = scmp.eq.s32.totalorder %s13, 1
    %p52 = por %p50, %p51
    %p53 = scmp.ne.s32.totalorder %s44, %s45
    %p54 = scmp.eq.s32.totalorder %s13, 0
    %p55 = por %p53, %p54
    %p56 = scmp.ne.s32.totalorder %s44, %s45
    %p57 = scmp.eq.s32.totalorder %s14, 1
    %p58 = por %p56, %p57
    %p60 = scmp.ne.s32.totalorder %s45, %s59
    %p61 = scmp.eq.s32.totalorder %s14, 0
    %p62 = por %p60, %p61
    %s63 = ssub.s32 %s8, %s15
    %p64 = scmp.eq.s32.totalorder %s63, 0
    %s66 = sadd.s32 %s65, 1
    %s67 = scalar_select %p64, %s65, %s66
    %p70 = pneg %p64
    %p71 = scmp.eq.s32.totalorder %s8, 1
    %p72 = por %p70, %p71
    %p73 = scmp.ne.s32.totalorder %s65, %s68
    %p74 = scmp.eq.s32.totalorder %s8, 0
    %p75 = por %p73, %p74
    %p76 = scmp.ne.s32.totalorder %s65, %s68
    %p77 = scmp.eq.s32.totalorder %s13, 1
    %p78 = por %p76, %p77
    %p79 = scmp.ne.s32.totalorder %s68, %s69
    %p80 = scmp.eq.s32.totalorder %s13, 0
    %p81 = por %p79, %p80
    %p82 = scmp.ne.s32.totalorder %s68, %s69
    %p83 = scmp.eq.s32.totalorder %s14, 1
    %p84 = por %p82, %p83
    %p86 = scmp.ne.s32.totalorder %s69, %s85
    %p87 = scmp.eq.s32.totalorder %s14, 0
    %p88 = por %p86, %p87
    %p89 = scmp.le.s32.totalorder 1, %s8
    %p90 = scmp.lt.s32.totalorder %s8, 3
    %p91 = pnand %p89, %p90
    %p92 = pneg %p91
    // Predicated region
    $region9: #{gcn_forward_pallas.4} parent=5 // pred_check
      _
    $region10: #{gcn_forward_pallas.4} parent=5 // pred_check_branch
      %94 = sbr.rel (%p91) target = $region12
    $region11: #{gcn_forward_pallas.4} parent=5 // pred_region
      %s95 = ssub.s32 %s8, 1
      // Predicated region
      $region13: #{gcn_forward_pallas.4} parent=11 // pred_check
        %p96 = pneg %p55
      $region14: #{gcn_forward_pallas.4} parent=11 // pred_check_branch
        %98 = sbr.rel (%p96) target = $region16
      $region15: #{gcn_forward_pallas.4} parent=11 // pred_region
        _
      $region16: #{gcn_forward_pallas.4} parent=11 // pred_fallthru
        _
    $region12: #{gcn_forward_pallas.4} parent=5 // pred_fallthru
      _
    %p99 = scmp.lt.s32.totalorder %s8, 2
    // Predicated region
    $region17: #{gcn_forward_pallas.4} parent=5 // pred_check
      %p100 = pneg %p99
    $region18: #{gcn_forward_pallas.4} parent=5 // pred_check_branch
      %102 = sbr.rel (%p100) target = $region20
    $region19: #{gcn_forward_pallas.4} parent=5 // pred_region
      // Predicated region
      $region21: #{gcn_forward_pallas.4} parent=19 // pred_check
        %p103 = pneg %p28
      $region22: #{gcn_forward_pallas.4} parent=19 // pred_check_branch
        %105 = sbr.rel (%p103) target = $region24
      $region23: #{gcn_forward_pallas.4} parent=19 // pred_region
        %s106 = smul.u32 16, %s8
        %p107 = scmp.lt.s32.totalorder %s106, 31
        %s108 = scalar_select %p107, %s106, 31
        %s109 = smul.addr %s108, 4
        %s110 = scalar_lea.vmem %s0, %s109
        %s111 = smul.u32 16, %s8
      $region24: #{gcn_forward_pallas.4} parent=19 // pred_fallthru
        _
    $region20: #{gcn_forward_pallas.4} parent=5 // pred_fallthru
      _
    %p112 = scmp.le.s32.totalorder 1, %s8
    %p113 = scmp.lt.s32.totalorder %s8, 3
    %p114 = pnand %p112, %p113
    %p115 = pneg %p114
    // Predicated region
    $region25: #{gcn_forward_pallas.4} parent=5 // pred_check
      _
    $region26: #{gcn_forward_pallas.4} parent=5 // pred_check_branch
      %117 = sbr.rel (%p114) target = $region28
    $region27: #{gcn_forward_pallas.4} parent=5 // pred_region
      %s118 = ssub.s32 %s8, 1
      %s119 = smul.u32 16, %s13
      %p120 = scmp.lt.s32.totalorder %s119, 31
      %s121 = scalar_select %p120, %s119, 31
      %s122 = smul.addr %s121, 4
      %s123 = scalar_lea.vmem %s0, %s122
      %p124 = pneg %p34
      %p125 = pneg %p31
      %p126 = pneg %p55
      %p127 = pneg %p52
      %p128 = pneg %p81
      %p129 = pneg %p78
      %s130 = smul.u32 16, %s13
      %p131 = scmp.lt.s32.totalorder %s130, 31
      %s132 = scalar_select %p131, %s130, 31
      %s133 = smul.addr %s132, 4
      %s134 = scalar_lea.vmem %s2, %s133
      %s135 = smul.u32 16, %s13
      %p136 = scmp.lt.s32.totalorder %s135, 31
      %s137 = scalar_select %p136, %s135, 31
      %s138 = smul.addr %s137, 4
      %s139 = scalar_lea.vmem %s0, %s138
      %s140 = smul.u32 16, %s13
      %s141 = smul.u32 16, %s13
      %p142 = scmp.lt.s32.totalorder %s141, 31
      %s143 = scalar_select %p142, %s141, 31
      %s144 = smul.addr %s143, 4
      %s145 = scalar_lea.vmem %s2, %s144
      %s146 = smul.u32 16, %s13
      %v148 = vld [vmem:[%s139] sm:$0xf]
      %v149 = vld [vmem:[%s139 + $0x4] sm:$0xf]
      %v150 = vld [vmem:[%s139 + $0x8] sm:$0xf]
      %v151 = vld [vmem:[%s139 + $0xc] sm:$0xf]
      %v152 = vld [vmem:[%s139 + $0x10] sm:$0xf]
      %v153 = vld [vmem:[%s139 + $0x14] sm:$0xf]
      %v154 = vld [vmem:[%s139 + $0x18] sm:$0xf]
      %v155 = vld [vmem:[%s139 + $0x1c] sm:$0xf]
      %v156 = vld [vmem:[%s139 + $0x20] sm:$0xf]
      %v157 = vld [vmem:[%s139 + $0x24] sm:$0xf]
      %v158 = vld [vmem:[%s139 + $0x28] sm:$0xf]
      %v159 = vld [vmem:[%s139 + $0x2c] sm:$0xf]
      %v160 = vld [vmem:[%s139 + $0x30] sm:$0xf]
      %v161 = vld [vmem:[%s139 + $0x34] sm:$0xf]
      %v162 = vld [vmem:[%s139 + $0x38] sm:$0xf]
      %v163 = vld [vmem:[%s139 + $0x3c] sm:$0xf]
      %v164 = vld [vmem:[%s1] sm:$0xf]
      %v165 = vld [vmem:[%s1 + $0x4] sm:$0xf]
      %v166 = vld [vmem:[%s1 + $0x8] sm:$0xf]
      %v167 = vld [vmem:[%s1 + $0xc] sm:$0xf]
      %v168 = vld [vmem:[%s1 + $0x10] sm:$0xf]
      %v169 = vld [vmem:[%s1 + $0x14] sm:$0xf]
      %v170 = vld [vmem:[%s1 + $0x18] sm:$0xf]
      %v171 = vld [vmem:[%s1 + $0x1c] sm:$0xf]
      %v172 = vld [vmem:[%s1 + $0x20] sm:$0xf]
      %v173 = vld [vmem:[%s1 + $0x24] sm:$0xf]
      %v174 = vld [vmem:[%s1 + $0x28] sm:$0xf]
      %v175 = vld [vmem:[%s1 + $0x2c] sm:$0xf]
      %v176 = vld [vmem:[%s1 + $0x30] sm:$0xf]
      %v177 = vld [vmem:[%s1 + $0x34] sm:$0xf]
      %v178 = vld [vmem:[%s1 + $0x38] sm:$0xf]
      %v179 = vld [vmem:[%s1 + $0x3c] sm:$0xf]
      %v196 = vunpack.c.l.b16 %v148
      %v197 = vunpack.c.l.b16 %v149
      %v198 = vunpack.c.l.b16 %v150
      %v199 = vunpack.c.l.b16 %v151
      %v200 = vunpack.c.l.b16 %v152
      %v201 = vunpack.c.l.b16 %v153
      %v202 = vunpack.c.l.b16 %v154
      %v203 = vunpack.c.l.b16 %v155
      %v204 = vunpack.c.l.b16 %v156
      %v205 = vunpack.c.l.b16 %v157
      %v206 = vunpack.c.l.b16 %v158
      %v207 = vunpack.c.l.b16 %v159
      %v208 = vunpack.c.l.b16 %v160
      %v209 = vunpack.c.l.b16 %v161
      %v210 = vunpack.c.l.b16 %v162
      %v211 = vunpack.c.l.b16 %v163
      %v212 = vpack.c.b16 %v197, %v196
      %v213 = vpack.c.b16 %v199, %v198
      %v214 = vpack.c.b16 %v201, %v200
      %v215 = vpack.c.b16 %v203, %v202
      %v216 = vpack.c.b16 %v205, %v204
      %v217 = vpack.c.b16 %v207, %v206
      %v218 = vpack.c.b16 %v209, %v208
      %v219 = vpack.c.b16 %v211, %v210
      %v244 = vunpack.c.l.b16 %v164
      %v245 = vunpack.c.l.b16 %v165
      %v246 = vunpack.c.l.b16 %v166
      %v247 = vunpack.c.l.b16 %v167
      %v248 = vunpack.c.l.b16 %v168
      %v249 = vunpack.c.l.b16 %v169
      %v250 = vunpack.c.l.b16 %v170
      %v251 = vunpack.c.l.b16 %v171
      %v252 = vunpack.c.l.b16 %v172
      %v253 = vunpack.c.l.b16 %v173
      %v254 = vunpack.c.l.b16 %v174
      %v255 = vunpack.c.l.b16 %v175
      %v256 = vunpack.c.l.b16 %v176
      %v257 = vunpack.c.l.b16 %v177
      %v258 = vunpack.c.l.b16 %v178
      %v259 = vunpack.c.l.b16 %v179
      %v260 = vpack.c.b16 %v245, %v244
      %v261 = vpack.c.b16 %v247, %v246
      %v262 = vpack.c.b16 %v249, %v248
      %v263 = vpack.c.b16 %v251, %v250
      %v264 = vpack.c.b16 %v253, %v252
      %v265 = vpack.c.b16 %v255, %v254
      %v266 = vpack.c.b16 %v257, %v256
      %v267 = vpack.c.b16 %v259, %v258
      %276 = vmatprep.subr.bf16.mxu0 0
      %277 = vmatpush1.bf16.msra.mxu0 %v260
      %278 = vmatprep.subr.bf16.mxu0 0
      %279 = vmatpush1.bf16.msra.mxu0 %v261
      %280 = vmatprep.subr.bf16.mxu0 0
      %281 = vmatpush1.bf16.msra.mxu0 %v262
      %282 = vmatprep.subr.bf16.mxu0 0
      %283 = vmatpush1.bf16.msra.mxu0 %v263
      %284 = vmatprep.subr.bf16.mxu0 0
      %285 = vmatpush1.bf16.msra.mxu0 %v264
      %286 = vmatprep.subr.bf16.mxu0 0
      %287 = vmatpush1.bf16.msra.mxu0 %v265
      %288 = vmatprep.subr.bf16.mxu0 0
      %289 = vmatpush1.bf16.msra.mxu0 %v266
      %290 = vmatprep.subr.bf16.mxu0 0
      %291 = vmatpush1.bf16.msra.mxu0 %v267
      %292 = vmatprep.subr.bf16.mxu0 0
      %293 = vmatpush1.bf16.msra.mxu0 0
      %294 = vmatprep.subr.bf16.mxu0 0
      %295 = vmatpush1.bf16.msra.mxu0 0
      %296 = vmatprep.subr.bf16.mxu0 0
      %297 = vmatpush1.bf16.msra.mxu0 0
      %298 = vmatprep.subr.bf16.mxu0 0
      %299 = vmatpush1.bf16.msra.mxu0 0
      %300 = vmatprep.subr.bf16.mxu0 0
      %301 = vmatpush1.bf16.msra.mxu0 0
      %302 = vmatprep.subr.bf16.mxu0 0
      %303 = vmatpush1.bf16.msra.mxu0 0
      %304 = vmatprep.subr.bf16.mxu0 0
      %305 = vmatpush1.bf16.msra.mxu0 0
      %306 = vmatprep.subr.bf16.mxu0 0
      %307 = vmatpush1.bf16.msra.mxu0 0
      %308 = vmatprep.mubr.bf16.mxu0 0
      %309 = vmatmul.mubr.bf16.gmra.mrb[0].mxu0 %v212
      %v310 = vpop.f32.mrb[0].mxu0
      %v311 = vadd.f32 0.0, %v310
      %v312 = vpop.f32.mrb[0].mxu0
      %v313 = vpop.f32.mrb[0].mxu0
      %v314 = vadd.f32 0.0, %v313
      %v315 = vpop.f32.mrb[0].mxu0
      %316 = vmatprep.mubr.bf16.mxu0 0
      %317 = vmatmul.mubr.bf16.gmra.mrb[0].mxu0 %v213
      %v318 = vpop.f32.mrb[0].mxu0
      %v319 = vadd.f32 0.0, %v318
      %v320 = vpop.f32.mrb[0].mxu0
      %v321 = vpop.f32.mrb[0].mxu0
      %v322 = vadd.f32 0.0, %v321
      %v323 = vpop.f32.mrb[0].mxu0
      %324 = vmatprep.mubr.bf16.mxu0 0
      %325 = vmatmul.mubr.bf16.gmra.mrb[0].mxu0 %v214
      %v326 = vpop.f32.mrb[0].mxu0
      %v327 = vadd.f32 0.0, %v326
      %v328 = vpop.f32.mrb[0].mxu0
      %v329 = vpop.f32.mrb[0].mxu0
      %v330 = vadd.f32 0.0, %v329
      %v331 = vpop.f32.mrb[0].mxu0
      %332 = vmatprep.mubr.bf16.mxu0 0
      %333 = vmatmul.mubr.bf16.gmra.mrb[0].mxu0 %v215
      %v334 = vpop.f32.mrb[0].mxu0
      %v335 = vadd.f32 0.0, %v334
      %v336 = vpop.f32.mrb[0].mxu0
      %v337 = vpop.f32.mrb[0].mxu0
      %v338 = vadd.f32 0.0, %v337
      %v339 = vpop.f32.mrb[0].mxu0
      %340 = vmatprep.mubr.bf16.mxu0 0
      %341 = vmatmul.mubr.bf16.gmra.mrb[0].mxu0 %v216
      %v342 = vpop.f32.mrb[0].mxu0
      %v343 = vadd.f32 0.0, %v342
      %v344 = vpop.f32.mrb[0].mxu0
      %v345 = vpop.f32.mrb[0].mxu0
      %v346 = vadd.f32 0.0, %v345
      %v347 = vpop.f32.mrb[0].mxu0
      %348 = vmatprep.mubr.bf16.mxu0 0
      %349 = vmatmul.mubr.bf16.gmra.mrb[0].mxu0 %v217
      %v350 = vpop.f32.mrb[0].mxu0
      %v351 = vadd.f32 0.0, %v350
      %v352 = vpop.f32.mrb[0].mxu0
      %v353 = vpop.f32.mrb[0].mxu0
      %v354 = vadd.f32 0.0, %v353
      %v355 = vpop.f32.mrb[0].mxu0
      %356 = vmatprep.mubr.bf16.mxu0 0
      %357 = vmatmul.mubr.bf16.gmra.mrb[0].mxu0 %v218
      %v358 = vpop.f32.mrb[0].mxu0
      %v359 = vadd.f32 0.0, %v358
      %v360 = vpop.f32.mrb[0].mxu0
      %v361 = vpop.f32.mrb[0].mxu0
      %v362 = vadd.f32 0.0, %v361
      %v363 = vpop.f32.mrb[0].mxu0
      %364 = vmatprep.mubr.bf16.mxu0 0
      %365 = vmatmul.mubr.bf16.gmra.mrb[0].mxu0 %v219
      %v366 = vpop.f32.mrb[0].mxu0
      %v367 = vadd.f32 0.0, %v366
      %v368 = vpop.f32.mrb[0].mxu0
      %v369 = vpop.f32.mrb[0].mxu0
      %v370 = vadd.f32 0.0, %v369
      %v371 = vpop.f32.mrb[0].mxu0
      %372 = vdwg.mxu0
      %v373 = vpack.c.bf16 %v314, %v311
      %v374 = vpack.c.bf16 %v322, %v319
      %v375 = vpack.c.bf16 %v330, %v327
      %v376 = vpack.c.bf16 %v338, %v335
      %v377 = vpack.c.bf16 %v346, %v343
      %v378 = vpack.c.bf16 %v354, %v351
      %v379 = vpack.c.bf16 %v362, %v359
      %v380 = vpack.c.bf16 %v370, %v367
      %v389 = vunpack.c.l.b16 %v373
      %v390 = vunpack.c.h.b16 %v373
      %v391 = vunpack.c.l.b16 %v374
      %v392 = vunpack.c.h.b16 %v374
      %v393 = vunpack.c.l.b16 %v375
      %v394 = vunpack.c.h.b16 %v375
      %v395 = vunpack.c.l.b16 %v376
      %v396 = vunpack.c.h.b16 %v376
      %v397 = vunpack.c.l.b16 %v377
      %v398 = vunpack.c.h.b16 %v377
      %v399 = vunpack.c.l.b16 %v378
      %v400 = vunpack.c.h.b16 %v378
      %v401 = vunpack.c.l.b16 %v379
      %v402 = vunpack.c.h.b16 %v379
      %v403 = vunpack.c.l.b16 %v380
      %v404 = vunpack.c.h.b16 %v380
      %v405 = vpack.c.b16 %v389, %v389
      %v406 = vpack.c.b16 %v390, %v390
      %v407 = vpack.c.b16 %v391, %v391
      %v408 = vpack.c.b16 %v392, %v392
      %v409 = vpack.c.b16 %v393, %v393
      %v410 = vpack.c.b16 %v394, %v394
      %v411 = vpack.c.b16 %v395, %v395
      %v412 = vpack.c.b16 %v396, %v396
      %v413 = vpack.c.b16 %v397, %v397
      %v414 = vpack.c.b16 %v398, %v398
      %v415 = vpack.c.b16 %v399, %v399
      %v416 = vpack.c.b16 %v400, %v400
      %v417 = vpack.c.b16 %v401, %v401
      %v418 = vpack.c.b16 %v402, %v402
      %v419 = vpack.c.b16 %v403, %v403
      %v420 = vpack.c.b16 %v404, %v404
      %437 = vst [vmem:[%s145] sm:$0xf] %v405
      %438 = vst [vmem:[%s145 + $0x4] sm:$0xf] %v406
      %439 = vst [vmem:[%s145 + $0x8] sm:$0xf] %v407
      %440 = vst [vmem:[%s145 + $0xc] sm:$0xf] %v408
      %441 = vst [vmem:[%s145 + $0x10] sm:$0xf] %v409
      %442 = vst [vmem:[%s145 + $0x14] sm:$0xf] %v410
      %443 = vst [vmem:[%s145 + $0x18] sm:$0xf] %v411
      %444 = vst [vmem:[%s145 + $0x1c] sm:$0xf] %v412
      %445 = vst [vmem:[%s145 + $0x20] sm:$0xf] %v413
      %446 = vst [vmem:[%s145 + $0x24] sm:$0xf] %v414
      %447 = vst [vmem:[%s145 + $0x28] sm:$0xf] %v415
      %448 = vst [vmem:[%s145 + $0x2c] sm:$0xf] %v416
      %449 = vst [vmem:[%s145 + $0x30] sm:$0xf] %v417
      %450 = vst [vmem:[%s145 + $0x34] sm:$0xf] %v418
      %451 = vst [vmem:[%s145 + $0x38] sm:$0xf] %v419
      %452 = vst [vmem:[%s145 + $0x3c] sm:$0xf] %v420
      %s453 = smul.u32 16, %s13
      %p454 = scmp.lt.s32.totalorder %s453, 31
      %s455 = scalar_select %p454, %s453, 31
      %s456 = smul.addr %s455, 4
      %s457 = scalar_lea.vmem %s2, %s456
      // Predicated region
      $region29: #{gcn_forward_pallas.4} parent=27 // pred_check
        %p458 = pneg %p78
      $region30: #{gcn_forward_pallas.4} parent=27 // pred_check_branch
        %460 = sbr.rel (%p458) target = $region32
      $region31: #{gcn_forward_pallas.4} parent=27 // pred_region
        %s461 = smul.u32 16, %s13
      $region32: #{gcn_forward_pallas.4} parent=27 // pred_fallthru
        _
    $region28: #{gcn_forward_pallas.4} parent=5 // pred_fallthru
      _
    %p462 = scmp.le.s32.totalorder 2, %s8
    // Predicated region
    $region33: #{gcn_forward_pallas.4} parent=5 // pred_check
      %p463 = pneg %p462
    $region34: #{gcn_forward_pallas.4} parent=5 // pred_check_branch
      %465 = sbr.rel (%p463) target = $region36
    $region35: #{gcn_forward_pallas.4} parent=5 // pred_region
      %s466 = ssub.s32 %s8, 2
      // Predicated region
      $region37: #{gcn_forward_pallas.4} parent=35 // pred_check
        %p467 = pneg %p84
      $region38: #{gcn_forward_pallas.4} parent=35 // pred_check_branch
        %469 = sbr.rel (%p467) target = $region40
      $region39: #{gcn_forward_pallas.4} parent=35 // pred_region
        %s470 = smul.u32 16, %s14
        %p471 = scmp.lt.s32.totalorder %s470, 31
        %s472 = scalar_select %p471, %s470, 31
        %s473 = smul.addr %s472, 4
        %s474 = scalar_lea.vmem %s2, %s473
      $region40: #{gcn_forward_pallas.4} parent=35 // pred_fallthru
        _
    $region36: #{gcn_forward_pallas.4} parent=5 // pred_fallthru
      _
  $region6: #{gcn_forward_pallas.4} parent=0 // loop_footer
    %s12 = sadd.s32 1, %s8
  $region7: #{gcn_forward_pallas.4} parent=0 // loop_footer_branch
    %7 = sbr.rel target = $region3
  $region8: #{gcn_forward_pallas.4} parent=0 // loop_exit
    _

// kernel: gcn_forward_pallas.5
$region0: #{gcn_forward_pallas.5}
  #allocation0 [shape = 'u32[]', space=smem, size = 0x4, offset = 0x4, fixed_abs, tag = 'smem constant byte address 0x4 - core index']
  #allocation1 [shape = 'u32[144,128]{1,0:T(1,128)}', space=vmem, size = 0x12000, scoped, tag = 'internal scratch']
  #allocation2 [shape = 'f32[128,128]{1,0:T(8,128)}', space=vmem, size = 0x10000, scoped, tag = 'scratch operand']
  %s0 = inlined_call_operand.vmem [shape: bf16[256,256], index: 0, kind: input, shape index: {}]
  %s1 = inlined_call_operand.vmem [shape: bf16[256,128], index: 1, kind: input, shape index: {}]
  %s2 = inlined_call_operand.vmem [shape: f32[256,1], index: 2, kind: input, shape index: {}]
  %s3 = inlined_call_operand.vmem [shape: f32[1,128], index: 3, kind: input, shape index: {}]
  %s4 = inlined_call_operand.vmem [shape: bf16[256,128], index: 4, kind: output, shape index: {}]
  %s5 = sld [smem:[#allocation0]]
  $region57: #{gcn_forward_pallas.5} parent=0
    _
  %s7 = ssub.s32 1, %s5
  %s8 = scalar_select 0, %s7, %s5
  loop: start=0, step=1, limit=4
  $region2: #{gcn_forward_pallas.5} parent=0 // loop_pre_header
    _
  $region3: #{gcn_forward_pallas.5} parent=0 // loop_header
    %s10 = sphi 0, %s14
    %p11 = scmp.ge.s32.totalorder %s10, 4
    %s17 = sphi 0, %s29
    %s18 = sphi 0, %s25
    %s19 = sphi 0, %s17
    %s20 = sphi 0, %s18
    %s21 = sphi 0, %s19
    %s22 = sphi 0, %s20
    %s34 = sphi 0, %s36
    %s37 = sphi 0, %s34
    %s38 = sphi 0, %s37
    %s54 = sphi 0, %s38
    %s60 = sphi 0, %s62
    %s63 = sphi 0, %s60
    %s64 = sphi 0, %s63
    %s80 = sphi 0, %s64
    %s86 = sphi 0, %s88
    %s89 = sphi 0, %s86
    %s90 = sphi 0, %s89
    %s106 = sphi 0, %s90
    %s110 = sphi 0, %s110
    %s112 = sphi 0, %s110
    %s113 = sphi 0, %s112
    %s127 = sphi 0, %s113
    %s133 = sphi 0, %s135
    %s136 = sphi 0, %s133
    %s137 = sphi 0, %s136
    %s153 = sphi 0, %s137
  $region4: #{gcn_forward_pallas.5} parent=0 // loop_header_branch
    %13 = sbr.rel (%p11) target = $region8
  $region5: #{gcn_forward_pallas.5} parent=0 // loop_body
    %s15 = ssub.s32 %s10, 1
    %s16 = ssub.s32 %s10, 2
    %s23 = sadd.s32 1, %s18
    %p24 = scmp.ge.s32.totalorder %s23, 1
    %s25 = scalar_select %p24, 0, %s23
    %s26 = sadd.s32 1, %s17
    %s27 = scalar_select %p24, %s26, %s17
    %p28 = scmp.ge.s32.totalorder %s27, 2
    %s29 = scalar_select %p28, 0, %s27
    %s30 = ssub.s32 %s17, %s29
    %s31 = ssub.s32 %s18, %s25
    %s32 = sor.u32 %s30, %s31
    %p33 = scmp.eq.s32.totalorder %s32, 0
    %s35 = sadd.s32 %s34, 1
    %s36 = scalar_select %p33, %s34, %s35
    %p39 = pneg %p33
    %p40 = scmp.eq.s32.totalorder %s10, 1
    %p41 = por %p39, %p40
    %p42 = scmp.ne.s32.totalorder %s34, %s37
    %p43 = scmp.eq.s32.totalorder %s10, 0
    %p44 = por %p42, %p43
    %p45 = scmp.ne.s32.totalorder %s34, %s37
    %p46 = scmp.eq.s32.totalorder %s15, 1
    %p47 = por %p45, %p46
    %p48 = scmp.ne.s32.totalorder %s37, %s38
    %p49 = scmp.eq.s32.totalorder %s15, 0
    %p50 = por %p48, %p49
    %p51 = scmp.ne.s32.totalorder %s37, %s38
    %p52 = scmp.eq.s32.totalorder %s16, 1
    %p53 = por %p51, %p52
    %p55 = scmp.ne.s32.totalorder %s38, %s54
    %p56 = scmp.eq.s32.totalorder %s16, 0
    %p57 = por %p55, %p56
    %s58 = ssub.s32 %s18, %s25
    %p59 = scmp.eq.s32.totalorder %s58, 0
    %s61 = sadd.s32 %s60, 1
    %s62 = scalar_select %p59, %s60, %s61
    %p65 = pneg %p59
    %p66 = scmp.eq.s32.totalorder %s10, 1
    %p67 = por %p65, %p66
    %p68 = scmp.ne.s32.totalorder %s60, %s63
    %p69 = scmp.eq.s32.totalorder %s10, 0
    %p70 = por %p68, %p69
    %p71 = scmp.ne.s32.totalorder %s60, %s63
    %p72 = scmp.eq.s32.totalorder %s15, 1
    %p73 = por %p71, %p72
    %p74 = scmp.ne.s32.totalorder %s63, %s64
    %p75 = scmp.eq.s32.totalorder %s15, 0
    %p76 = por %p74, %p75
    %p77 = scmp.ne.s32.totalorder %s63, %s64
    %p78 = scmp.eq.s32.totalorder %s16, 1
    %p79 = por %p77, %p78
    %p81 = scmp.ne.s32.totalorder %s64, %s80
    %p82 = scmp.eq.s32.totalorder %s16, 0
    %p83 = por %p81, %p82
    %s84 = ssub.s32 %s17, %s29
    %p85 = scmp.eq.s32.totalorder %s84, 0
    %s87 = sadd.s32 %s86, 1
    %s88 = scalar_select %p85, %s86, %s87
    %p91 = pneg %p85
    %p92 = scmp.eq.s32.totalorder %s10, 1
    %p93 = por %p91, %p92
    %p94 = scmp.ne.s32.totalorder %s86, %s89
    %p95 = scmp.eq.s32.totalorder %s10, 0
    %p96 = por %p94, %p95
    %p97 = scmp.ne.s32.totalorder %s86, %s89
    %p98 = scmp.eq.s32.totalorder %s15, 1
    %p99 = por %p97, %p98
    %p100 = scmp.ne.s32.totalorder %s89, %s90
    %p101 = scmp.eq.s32.totalorder %s15, 0
    %p102 = por %p100, %p101
    %p103 = scmp.ne.s32.totalorder %s89, %s90
    %p104 = scmp.eq.s32.totalorder %s16, 1
    %p105 = por %p103, %p104
    %p107 = scmp.ne.s32.totalorder %s90, %s106
    %p108 = scmp.eq.s32.totalorder %s16, 0
    %p109 = por %p107, %p108
    %s111 = sadd.s32 %s110, 1
    %p114 = scmp.eq.s32.totalorder %s10, 1
    %p115 = scmp.ne.s32.totalorder %s110, %s112
    %p116 = scmp.eq.s32.totalorder %s10, 0
    %p117 = por %p115, %p116
    %p118 = scmp.ne.s32.totalorder %s110, %s112
    %p119 = scmp.eq.s32.totalorder %s15, 1
    %p120 = por %p118, %p119
    %p121 = scmp.ne.s32.totalorder %s112, %s113
    %p122 = scmp.eq.s32.totalorder %s15, 0
    %p123 = por %p121, %p122
    %p124 = scmp.ne.s32.totalorder %s112, %s113
    %p125 = scmp.eq.s32.totalorder %s16, 1
    %p126 = por %p124, %p125
    %p128 = scmp.ne.s32.totalorder %s113, %s127
    %p129 = scmp.eq.s32.totalorder %s16, 0
    %p130 = por %p128, %p129
    %s131 = ssub.s32 %s17, %s29
    %p132 = scmp.eq.s32.totalorder %s131, 0
    %s134 = sadd.s32 %s133, 1
    %s135 = scalar_select %p132, %s133, %s134
    %p138 = pneg %p132
    %p139 = scmp.eq.s32.totalorder %s10, 1
    %p140 = por %p138, %p139
    %p141 = scmp.ne.s32.totalorder %s133, %s136
    %p142 = scmp.eq.s32.totalorder %s10, 0
    %p143 = por %p141, %p142
    %p144 = scmp.ne.s32.totalorder %s133, %s136
    %p145 = scmp.eq.s32.totalorder %s15, 1
    %p146 = por %p144, %p145
    %p147 = scmp.ne.s32.totalorder %s136, %s137
    %p148 = scmp.eq.s32.totalorder %s15, 0
    %p149 = por %p147, %p148
    %p150 = scmp.ne.s32.totalorder %s136, %s137
    %p151 = scmp.eq.s32.totalorder %s16, 1
    %p152 = por %p150, %p151
    %p154 = scmp.ne.s32.totalorder %s137, %s153
    %p155 = scmp.eq.s32.totalorder %s16, 0
    %p156 = por %p154, %p155
    %p157 = scmp.le.s32.totalorder 1, %s10
    %p158 = scmp.lt.s32.totalorder %s10, 3
    %p159 = pnand %p157, %p158
    %p160 = pneg %p159
    // Predicated region
    $region9: #{gcn_forward_pallas.5} parent=5 // pred_check
      _
    $region10: #{gcn_forward_pallas.5} parent=5 // pred_check_branch
      %162 = sbr.rel (%p159) target = $region12
    $region11: #{gcn_forward_pallas.5} parent=5 // pred_region
      %s163 = ssub.s32 %s10, 1
      // Predicated region
      $region13: #{gcn_forward_pallas.5} parent=11 // pred_check
        %p164 = pneg %p76
      $region14: #{gcn_forward_pallas.5} parent=11 // pred_check_branch
        %166 = sbr.rel (%p164) target = $region16
      $region15: #{gcn_forward_pallas.5} parent=11 // pred_region
        %s167 = smul.u32 32, %s20
        %p168 = scmp.lt.s32.totalorder %s167, 31
        %s169 = scalar_select %p168, %s167, 31
        %s170 = smul.addr %s169, 4
        %s171 = scalar_lea.vmem %s1, %s170
        %s172 = smul.u32 32, %s20
      $region16: #{gcn_forward_pallas.5} parent=11 // pred_fallthru
        _
      // Predicated region
      $region17: #{gcn_forward_pallas.5} parent=11 // pred_check
        %p173 = pneg %p123
      $region18: #{gcn_forward_pallas.5} parent=11 // pred_check_branch
        %175 = sbr.rel (%p173) target = $region20
      $region19: #{gcn_forward_pallas.5} parent=11 // pred_region
        _
      $region20: #{gcn_forward_pallas.5} parent=11 // pred_fallthru
        _
    $region12: #{gcn_forward_pallas.5} parent=5 // pred_fallthru
      _
    %p176 = scmp.lt.s32.totalorder %s10, 2
    // Predicated region
    $region21: #{gcn_forward_pallas.5} parent=5 // pred_check
      %p177 = pneg %p176
    $region22: #{gcn_forward_pallas.5} parent=5 // pred_check_branch
      %179 = sbr.rel (%p177) target = $region24
    $region23: #{gcn_forward_pallas.5} parent=5 // pred_region
      // Predicated region
      $region25: #{gcn_forward_pallas.5} parent=23 // pred_check
        %p180 = pneg %p44
      $region26: #{gcn_forward_pallas.5} parent=23 // pred_check_branch
        %182 = sbr.rel (%p180) target = $region28
      $region27: #{gcn_forward_pallas.5} parent=23 // pred_region
        %s183 = smul.u32 16, %s17
        %s184 = smul.u32 2, %s18
        %p185 = scmp.lt.s32.totalorder %s183, 31
        %s186 = scalar_select %p185, %s183, 31
        %p187 = scmp.lt.s32.totalorder %s184, 1
        %s188 = scalar_select %p187, %s184, 1
        %s189 = smul.addr %s186, 2
        %s190 = sadd.s32 %s188, %s189
        %s191 = smul.addr %s190, 4
        %s192 = scalar_lea.vmem %s0, %s191
        %s193 = smul.u32 16, %s17
        %s194 = smul.u32 2, %s18
      $region28: #{gcn_forward_pallas.5} parent=23 // pred_fallthru
        _
      // Predicated region
      $region29: #{gcn_forward_pallas.5} parent=23 // pred_check
        %p195 = pneg %p96
      $region30: #{gcn_forward_pallas.5} parent=23 // pred_check_branch
        %197 = sbr.rel (%p195) target = $region32
      $region31: #{gcn_forward_pallas.5} parent=23 // pred_region
        %s198 = smul.u32 16, %s17
        %p199 = scmp.lt.s32.totalorder %s198, 31
        %s200 = scalar_select %p199, %s198, 31
        %s201 = smul.addr %s200, 8
        %s202 = scalar_lea.vmem %s2, %s201
        %s203 = smul.u32 16, %s17
      $region32: #{gcn_forward_pallas.5} parent=23 // pred_fallthru
        _
    $region24: #{gcn_forward_pallas.5} parent=5 // pred_fallthru
      _
    %p204 = scmp.le.s32.totalorder 1, %s10
    %p205 = scmp.lt.s32.totalorder %s10, 3
    %p206 = pnand %p204, %p205
    %p207 = pneg %p206
    // Predicated region
    $region33: #{gcn_forward_pallas.5} parent=5 // pred_check
      _
    $region34: #{gcn_forward_pallas.5} parent=5 // pred_check_branch
      %209 = sbr.rel (%p206) target = $region36
    $region35: #{gcn_forward_pallas.5} parent=5 // pred_region
      %s210 = ssub.s32 %s10, 1
      %s211 = smul.u32 16, %s19
      %s212 = smul.u32 2, %s20
      %p213 = scmp.lt.s32.totalorder %s211, 31
      %s214 = scalar_select %p213, %s211, 31
      %p215 = scmp.lt.s32.totalorder %s212, 1
      %s216 = scalar_select %p215, %s212, 1
      %s217 = smul.addr %s214, 2
      %s218 = sadd.s32 %s216, %s217
      %s219 = smul.addr %s218, 4
      %s220 = scalar_lea.vmem %s0, %s219
      %p221 = pneg %p50
      %p222 = pneg %p47
      %s223 = smul.u32 32, %s20
      %p224 = scmp.lt.s32.totalorder %s223, 31
      %s225 = scalar_select %p224, %s223, 31
      %s226 = smul.addr %s225, 4
      %s227 = scalar_lea.vmem %s1, %s226
      %p228 = pneg %p76
      %p229 = pneg %p73
      %s230 = smul.u32 16, %s19
      %p231 = scmp.lt.s32.totalorder %s230, 31
      %s232 = scalar_select %p231, %s230, 31
      %s233 = smul.addr %s232, 8
      %s234 = scalar_lea.vmem %s2, %s233
      %p235 = pneg %p102
      %p236 = pneg %p99
      %p237 = pneg %p123
      %p238 = pneg %p120
      %p239 = pneg %p149
      %p240 = pneg %p146
      %s241 = smul.u32 16, %s19
      %p242 = scmp.lt.s32.totalorder %s241, 31
      %s243 = scalar_select %p242, %s241, 31
      %s244 = smul.addr %s243, 4
      %s245 = scalar_lea.vmem %s4, %s244
      %s246 = smul.u32 16, %s19
      %s247 = smul.u32 2, %s20
      %p248 = scmp.lt.s32.totalorder %s246, 31
      %s249 = scalar_select %p248, %s246, 31
      %p250 = scmp.lt.s32.totalorder %s247, 1
      %s251 = scalar_select %p250, %s247, 1
      %s252 = smul.addr %s249, 2
      %s253 = sadd.s32 %s251, %s252
      %s254 = smul.addr %s253, 4
      %s255 = scalar_lea.vmem %s0, %s254
      %s256 = smul.u32 16, %s19
      %s257 = smul.u32 2, %s20
      %s258 = smul.u32 32, %s20
      %p259 = scmp.lt.s32.totalorder %s258, 31
      %s260 = scalar_select %p259, %s258, 31
      %s261 = smul.addr %s260, 4
      %s262 = scalar_lea.vmem %s1, %s261
      %s263 = smul.u32 32, %s20
      %s264 = smul.u32 16, %s19
      %p265 = scmp.lt.s32.totalorder %s264, 31
      %s266 = scalar_select %p265, %s264, 31
      %s267 = smul.addr %s266, 8
      %s268 = scalar_lea.vmem %s2, %s267
      %s269 = smul.u32 16, %s19
      %s270 = smul.u32 16, %s19
      %p271 = scmp.lt.s32.totalorder %s270, 31
      %s272 = scalar_select %p271, %s270, 31
      %s273 = smul.addr %s272, 4
      %s274 = scalar_lea.vmem %s4, %s273
      %s275 = smul.u32 16, %s19
      %p277 = scmp.eq.s32.totalorder %s20, 0
      // Predicated region
      $region37: #{gcn_forward_pallas.5} parent=35 // pred_check
        %p278 = pneg %p277
      $region38: #{gcn_forward_pallas.5} parent=35 // pred_check_branch
        %280 = sbr.rel (%p278) target = $region40
      $region39: #{gcn_forward_pallas.5} parent=35 // pred_region
        %281 = vst [vmem:[#allocation2] sm:$0xff] 0.0
        %282 = vst [vmem:[#allocation2 + $0x8] sm:$0xff] 0.0
        %283 = vst [vmem:[#allocation2 + $0x10] sm:$0xff] 0.0
        %284 = vst [vmem:[#allocation2 + $0x18] sm:$0xff] 0.0
        %285 = vst [vmem:[#allocation2 + $0x20] sm:$0xff] 0.0
        %286 = vst [vmem:[#allocation2 + $0x28] sm:$0xff] 0.0
        %287 = vst [vmem:[#allocation2 + $0x30] sm:$0xff] 0.0
        %288 = vst [vmem:[#allocation2 + $0x38] sm:$0xff] 0.0
        %289 = vst [vmem:[#allocation2 + $0x40] sm:$0xff] 0.0
        %290 = vst [vmem:[#allocation2 + $0x48] sm:$0xff] 0.0
        %291 = vst [vmem:[#allocation2 + $0x50] sm:$0xff] 0.0
        %292 = vst [vmem:[#allocation2 + $0x58] sm:$0xff] 0.0
        %293 = vst [vmem:[#allocation2 + $0x60] sm:$0xff] 0.0
        %294 = vst [vmem:[#allocation2 + $0x68] sm:$0xff] 0.0
        %295 = vst [vmem:[#allocation2 + $0x70] sm:$0xff] 0.0
        %296 = vst [vmem:[#allocation2 + $0x78] sm:$0xff] 0.0
      $region40: #{gcn_forward_pallas.5} parent=35 // pred_fallthru
        _
      %v297 = vld [vmem:[#allocation2] sm:$0xff]
      %v298 = vld [vmem:[#allocation2 + $0x8] sm:$0xff]
      %v299 = vld [vmem:[#allocation2 + $0x10] sm:$0xff]
      %v300 = vld [vmem:[#allocation2 + $0x18] sm:$0xff]
      %v301 = vld [vmem:[#allocation2 + $0x20] sm:$0xff]
      %v302 = vld [vmem:[#allocation2 + $0x28] sm:$0xff]
      %v303 = vld [vmem:[#allocation2 + $0x30] sm:$0xff]
      %v304 = vld [vmem:[#allocation2 + $0x38] sm:$0xff]
      %v305 = vld [vmem:[#allocation2 + $0x40] sm:$0xff]
      %v306 = vld [vmem:[#allocation2 + $0x48] sm:$0xff]
      %v307 = vld [vmem:[#allocation2 + $0x50] sm:$0xff]
      %v308 = vld [vmem:[#allocation2 + $0x58] sm:$0xff]
      %v309 = vld [vmem:[#allocation2 + $0x60] sm:$0xff]
      %v310 = vld [vmem:[#allocation2 + $0x68] sm:$0xff]
      %v311 = vld [vmem:[#allocation2 + $0x70] sm:$0xff]
      %v312 = vld [vmem:[#allocation2 + $0x78] sm:$0xff]
      %v313 = vld [vmem:[%s255] sm:$0xff]
      %v314 = vld [vmem:[%s255 + $0x8] sm:$0xff]
      %v315 = vld [vmem:[%s255 + $0x10] sm:$0xff]
      %v316 = vld [vmem:[%s255 + $0x18] sm:$0xff]
      %v317 = vld [vmem:[%s255 + $0x20] sm:$0xff]
      %v318 = vld [vmem:[%s255 + $0x28] sm:$0xff]
      %v319 = vld [vmem:[%s255 + $0x30] sm:$0xff]
      %v320 = vld [vmem:[%s255 + $0x38] sm:$0xff]
      %v321 = vld [vmem:[%s255 + $0x40] sm:$0xff]
      %v322 = vld [vmem:[%s255 + $0x48] sm:$0xff]
      %v323 = vld [vmem:[%s255 + $0x50] sm:$0xff]
      %v324 = vld [vmem:[%s255 + $0x58] sm:$0xff]
      %v325 = vld [vmem:[%s255 + $0x60] sm:$0xff]
      %v326 = vld [vmem:[%s255 + $0x68] sm:$0xff]
      %v327 = vld [vmem:[%s255 + $0x70] sm:$0xff]
      %v328 = vld [vmem:[%s255 + $0x78] sm:$0xff]
      %v329 = vld [vmem:[%s262] sm:$0xf]
      %v330 = vld [vmem:[%s262 + $0x4] sm:$0xf]
      %v331 = vld [vmem:[%s262 + $0x8] sm:$0xf]
      %v332 = vld [vmem:[%s262 + $0xc] sm:$0xf]
      %v333 = vld [vmem:[%s262 + $0x10] sm:$0xf]
      %v334 = vld [vmem:[%s262 + $0x14] sm:$0xf]
      %v335 = vld [vmem:[%s262 + $0x18] sm:$0xf]
      %v336 = vld [vmem:[%s262 + $0x1c] sm:$0xf]
      %v337 = vld [vmem:[%s262 + $0x20] sm:$0xf]
      %v338 = vld [vmem:[%s262 + $0x24] sm:$0xf]
      %v339 = vld [vmem:[%s262 + $0x28] sm:$0xf]
      %v340 = vld [vmem:[%s262 + $0x2c] sm:$0xf]
      %v341 = vld [vmem:[%s262 + $0x30] sm:$0xf]
      %v342 = vld [vmem:[%s262 + $0x34] sm:$0xf]
      %v343 = vld [vmem:[%s262 + $0x38] sm:$0xf]
      %v344 = vld [vmem:[%s262 + $0x3c] sm:$0xf]
      %v345 = vld [vmem:[%s262 + $0x40] sm:$0xf]
      %v346 = vld [vmem:[%s262 + $0x44] sm:$0xf]
      %v347 = vld [vmem:[%s262 + $0x48] sm:$0xf]
      %v348 = vld [vmem:[%s262 + $0x4c] sm:$0xf]
      %v349 = vld [vmem:[%s262 + $0x50] sm:$0xf]
      %v350 = vld [vmem:[%s262 + $0x54] sm:$0xf]
      %v351 = vld [vmem:[%s262 + $0x58] sm:$0xf]
      %v352 = vld [vmem:[%s262 + $0x5c] sm:$0xf]
      %v353 = vld [vmem:[%s262 + $0x60] sm:$0xf]
      %v354 = vld [vmem:[%s262 + $0x64] sm:$0xf]
      %v355 = vld [vmem:[%s262 + $0x68] sm:$0xf]
      %v356 = vld [vmem:[%s262 + $0x6c] sm:$0xf]
      %v357 = vld [vmem:[%s262 + $0x70] sm:$0xf]
      %v358 = vld [vmem:[%s262 + $0x74] sm:$0xf]
      %v359 = vld [vmem:[%s262 + $0x78] sm:$0xf]
      %v360 = vld [vmem:[%s262 + $0x7c] sm:$0xf]
      %v377 = vunpack.c.l.b16 %v313
      %v378 = vunpack.c.h.b16 %v313
      %v379 = vunpack.c.l.b16 %v314
      %v380 = vunpack.c.h.b16 %v314
      %v381 = vunpack.c.l.b16 %v315
      %v382 = vunpack.c.h.b16 %v315
      %v383 = vunpack.c.l.b16 %v316
      %v384 = vunpack.c.h.b16 %v316
      %v385 = vunpack.c.l.b16 %v317
      %v386 = vunpack.c.h.b16 %v317
      %v387 = vunpack.c.l.b16 %v318
      %v388 = vunpack.c.h.b16 %v318
      %v389 = vunpack.c.l.b16 %v319
      %v390 = vunpack.c.h.b16 %v319
      %v391 = vunpack.c.l.b16 %v320
      %v392 = vunpack.c.h.b16 %v320
      %v393 = vunpack.c.l.b16 %v321
      %v394 = vunpack.c.h.b16 %v321
      %v395 = vunpack.c.l.b16 %v322
      %v396 = vunpack.c.h.b16 %v322
      %v397 = vunpack.c.l.b16 %v323
      %v398 = vunpack.c.h.b16 %v323
      %v399 = vunpack.c.l.b16 %v324
      %v400 = vunpack.c.h.b16 %v324
      %v401 = vunpack.c.l.b16 %v325
      %v402 = vunpack.c.h.b16 %v325
      %v403 = vunpack.c.l.b16 %v326
      %v404 = vunpack.c.h.b16 %v326
      %v405 = vunpack.c.l.b16 %v327
      %v406 = vunpack.c.h.b16 %v327
      %v407 = vunpack.c.l.b16 %v328
      %v408 = vunpack.c.h.b16 %v328
      %v409 = vpack.c.b16 %v379, %v377
      %v410 = vpack.c.b16 %v380, %v378
      %v411 = vpack.c.b16 %v383, %v381
      %v412 = vpack.c.b16 %v384, %v382
      %v413 = vpack.c.b16 %v387, %v385
      %v414 = vpack.c.b16 %v388, %v386
      %v415 = vpack.c.b16 %v391, %v389
      %v416 = vpack.c.b16 %v392, %v390
      %v417 = vpack.c.b16 %v395, %v393
      %v418 = vpack.c.b16 %v396, %v394
      %v419 = vpack.c.b16 %v399, %v397
      %v420 = vpack.c.b16 %v400, %v398
      %v421 = vpack.c.b16 %v403, %v401
      %v422 = vpack.c.b16 %v404, %v402
      %v423 = vpack.c.b16 %v407, %v405
      %v424 = vpack.c.b16 %v408, %v406
      %v473 = vunpack.c.l.b16 %v329
      %v474 = vunpack.c.l.b16 %v330
      %v475 = vunpack.c.l.b16 %v331
      %v476 = vunpack.c.l.b16 %v332
      %v477 = vunpack.c.l.b16 %v333
      %v478 = vunpack.c.l.b16 %v334
      %v479 = vunpack.c.l.b16 %v335
      %v480 = vunpack.c.l.b16 %v336
      %v481 = vunpack.c.l.b16 %v337
      %v482 = vunpack.c.l.b16 %v338
      %v483 = vunpack.c.l.b16 %v339
      %v484 = vunpack.c.l.b16 %v340
      %v485 = vunpack.c.l.b16 %v341
      %v486 = vunpack.c.l.b16 %v342
      %v487 = vunpack.c.l.b16 %v343
      %v488 = vunpack.c.l.b16 %v344
      %v489 = vunpack.c.l.b16 %v345
      %v490 = vunpack.c.l.b16 %v346
      %v491 = vunpack.c.l.b16 %v347
      %v492 = vunpack.c.l.b16 %v348
      %v493 = vunpack.c.l.b16 %v349
      %v494 = vunpack.c.l.b16 %v350
      %v495 = vunpack.c.l.b16 %v351
      %v496 = vunpack.c.l.b16 %v352
      %v497 = vunpack.c.l.b16 %v353
      %v498 = vunpack.c.l.b16 %v354
      %v499 = vunpack.c.l.b16 %v355
      %v500 = vunpack.c.l.b16 %v356
      %v501 = vunpack.c.l.b16 %v357
      %v502 = vunpack.c.l.b16 %v358
      %v503 = vunpack.c.l.b16 %v359
      %v504 = vunpack.c.l.b16 %v360
      %v505 = vpack.c.b16 %v474, %v473
      %v506 = vpack.c.b16 %v476, %v475
      %v507 = vpack.c.b16 %v478, %v477
      %v508 = vpack.c.b16 %v480, %v479
      %v509 = vpack.c.b16 %v482, %v481
      %v510 = vpack.c.b16 %v484, %v483
      %v511 = vpack.c.b16 %v486, %v485
      %v512 = vpack.c.b16 %v488, %v487
      %v513 = vpack.c.b16 %v490, %v489
      %v514 = vpack.c.b16 %v492, %v491
      %v515 = vpack.c.b16 %v494, %v493
      %v516 = vpack.c.b16 %v496, %v495
      %v517 = vpack.c.b16 %v498, %v497
      %v518 = vpack.c.b16 %v500, %v499
      %v519 = vpack.c.b16 %v502, %v501
      %v520 = vpack.c.b16 %v504, %v503
      %537 = vmatprep.subr.bf16.mxu0 0
      %538 = vmatpush1.bf16.msra.mxu0 %v505
      %539 = vmatprep.subr.bf16.mxu0 0
      %540 = vmatpush1.bf16.msra.mxu0 %v506
      %541 = vmatprep.subr.bf16.mxu0 0
      %542 = vmatpush1.bf16.msra.mxu0 %v507
      %543 = vmatprep.subr.bf16.mxu0 0
      %544 = vmatpush1.bf16.msra.mxu0 %v508
      %545 = vmatprep.subr.bf16.mxu0 0
      %546 = vmatpush1.bf16.msra.mxu0 %v509
      %547 = vmatprep.subr.bf16.mxu0 0
      %548 = vmatpush1.bf16.msra.mxu0 %v510
      %549 = vmatprep.subr.bf16.mxu0 0
      %550 = vmatpush1.bf16.msra.mxu0 %v511
      %551 = vmatprep.subr.bf16.mxu0 0
      %552 = vmatpush1.bf16.msra.mxu0 %v512
      %553 = vmatprep.subr.bf16.mxu0 0
      %554 = vmatpush1.bf16.msra.mxu0 %v513
      %555 = vmatprep.subr.bf16.mxu0 0
      %556 = vmatpush1.bf16.msra.mxu0 %v514
      %557 = vmatprep.subr.bf16.mxu0 0
      %558 = vmatpush1.bf16.msra.mxu0 %v515
      %559 = vmatprep.subr.bf16.mxu0 0
      %560 = vmatpush1.bf16.msra.mxu0 %v516
      %561 = vmatprep.subr.bf16.mxu0 0
      %562 = vmatpush1.bf16.msra.mxu0 %v517
      %563 = vmatprep.subr.bf16.mxu0 0
      %564 = vmatpush1.bf16.msra.mxu0 %v518
      %565 = vmatprep.subr.bf16.mxu0 0
      %566 = vmatpush1.bf16.msra.mxu0 %v519
      %567 = vmatprep.subr.bf16.mxu0 0
      %568 = vmatpush1.bf16.msra.mxu0 %v520
      %569 = vmatprep.mubr.bf16.mxu0 %v410
      %570 = vmatmul.mubr.bf16.gmra.mrb[0].mxu0 %v409
      %v571 = vpop.f32.mrb[0].mxu0
      %v572 = vadd.f32 0.0, %v571
      %v573 = vpop.f32.mrb[0].mxu0
      %v574 = vpop.f32.mrb[0].mxu0
      %v575 = vadd.f32 0.0, %v574
      %v576 = vpop.f32.mrb[0].mxu0
      %577 = vmatprep.mubr.bf16.mxu0 %v412
      %578 = vmatmul.mubr.bf16.gmra.mrb[0].mxu0 %v411
      %v579 = vpop.f32.mrb[0].mxu0
      %v580 = vadd.f32 0.0, %v579
      %v581 = vpop.f32.mrb[0].mxu0
      %v582 = vpop.f32.mrb[0].mxu0
      %v583 = vadd.f32 0.0, %v582
      %v584 = vpop.f32.mrb[0].mxu0
      %585 = vmatprep.mubr.bf16.mxu0 %v414
      %586 = vmatmul.mubr.bf16.gmra.mrb[0].mxu0 %v413
      %v587 = vpop.f32.mrb[0].mxu0
      %v588 = vadd.f32 0.0, %v587
      %v589 = vpop.f32.mrb[0].mxu0
      %v590 = vpop.f32.mrb[0].mxu0
      %v591 = vadd.f32 0.0, %v590
      %v592 = vpop.f32.mrb[0].mxu0
      %593 = vmatprep.mubr.bf16.mxu0 %v416
      %594 = vmatmul.mubr.bf16.gmra.mrb[0].mxu0 %v415
      %v595 = vpop.f32.mrb[0].mxu0
      %v596 = vadd.f32 0.0, %v595
      %v597 = vpop.f32.mrb[0].mxu0
      %v598 = vpop.f32.mrb[0].mxu0
      %v599 = vadd.f32 0.0, %v598
      %v600 = vpop.f32.mrb[0].mxu0
      %601 = vmatprep.mubr.bf16.mxu0 %v418
      %602 = vmatmul.mubr.bf16.gmra.mrb[0].mxu0 %v417
      %v603 = vpop.f32.mrb[0].mxu0
      %v604 = vadd.f32 0.0, %v603
      %v605 = vpop.f32.mrb[0].mxu0
      %v606 = vpop.f32.mrb[0].mxu0
      %v607 = vadd.f32 0.0, %v606
      %v608 = vpop.f32.mrb[0].mxu0
      %609 = vmatprep.mubr.bf16.mxu0 %v420
      %610 = vmatmul.mubr.bf16.gmra.mrb[0].mxu0 %v419
      %v611 = vpop.f32.mrb[0].mxu0
      %v612 = vadd.f32 0.0, %v611
      %v613 = vpop.f32.mrb[0].mxu0
      %v614 = vpop.f32.mrb[0].mxu0
      %v615 = vadd.f32 0.0, %v614
      %v616 = vpop.f32.mrb[0].mxu0
      %617 = vmatprep.mubr.bf16.mxu0 %v422
      %618 = vmatmul.mubr.bf16.gmra.mrb[0].mxu0 %v421
      %v619 = vpop.f32.mrb[0].mxu0
      %v620 = vadd.f32 0.0, %v619
      %v621 = vpop.f32.mrb[0].mxu0
      %v622 = vpop.f32.mrb[0].mxu0
      %v623 = vadd.f32 0.0, %v622
      %v624 = vpop.f32.mrb[0].mxu0
      %625 = vmatprep.mubr.bf16.mxu0 %v424
      %626 = vmatmul.mubr.bf16.gmra.mrb[0].mxu0 %v423
      %v627 = vpop.f32.mrb[0].mxu0
      %v628 = vadd.f32 0.0, %v627
      %v629 = vpop.f32.mrb[0].mxu0
      %v630 = vpop.f32.mrb[0].mxu0
      %v631 = vadd.f32 0.0, %v630
      %v632 = vpop.f32.mrb[0].mxu0
      %633 = vdwg.mxu0
      %v634 = vadd.f32 %v297, %v572
      %v635 = vadd.f32 %v298, %v575
      %v636 = vadd.f32 %v299, %v580
      %v637 = vadd.f32 %v300, %v583
      %v638 = vadd.f32 %v301, %v588
      %v639 = vadd.f32 %v302, %v591
      %v640 = vadd.f32 %v303, %v596
      %v641 = vadd.f32 %v304, %v599
      %v642 = vadd.f32 %v305, %v604
      %v643 = vadd.f32 %v306, %v607
      %v644 = vadd.f32 %v307, %v612
      %v645 = vadd.f32 %v308, %v615
      %v646 = vadd.f32 %v309, %v620
      %v647 = vadd.f32 %v310, %v623
      %v648 = vadd.f32 %v311, %v628
      %v649 = vadd.f32 %v312, %v631
      %650 = vst [vmem:[#allocation2] sm:$0xff] %v634
      %651 = vst [vmem:[#allocation2 + $0x8] sm:$0xff] %v635
      %652 = vst [vmem:[#allocation2 + $0x10] sm:$0xff] %v636
      %653 = vst [vmem:[#allocation2 + $0x18] sm:$0xff] %v637
      %654 = vst [vmem:[#allocation2 + $0x20] sm:$0xff] %v638
      %655 = vst [vmem:[#allocation2 + $0x28] sm:$0xff] %v639
      %656 = vst [vmem:[#allocation2 + $0x30] sm:$0xff] %v640
      %657 = vst [vmem:[#allocation2 + $0x38] sm:$0xff] %v641
      %658 = vst [vmem:[#allocation2 + $0x40] sm:$0xff] %v642
      %659 = vst [vmem:[#allocation2 + $0x48] sm:$0xff] %v643
      %660 = vst [vmem:[#allocation2 + $0x50] sm:$0xff] %v644
      %661 = vst [vmem:[#allocation2 + $0x58] sm:$0xff] %v645
      %662 = vst [vmem:[#allocation2 + $0x60] sm:$0xff] %v646
      %663 = vst [vmem:[#allocation2 + $0x68] sm:$0xff] %v647
      %664 = vst [vmem:[#allocation2 + $0x70] sm:$0xff] %v648
      %665 = vst [vmem:[#allocation2 + $0x78] sm:$0xff] %v649
      // Predicated region
      $region41: #{gcn_forward_pallas.5} parent=35 // pred_check
        %p666 = pneg %p277
      $region42: #{gcn_forward_pallas.5} parent=35 // pred_check_branch
        %668 = sbr.rel (%p666) target = $region44
      $region43: #{gcn_forward_pallas.5} parent=35 // pred_region
        %v669 = vld [vmem:[#allocation2] sm:$0xff]
        %v670 = vld [vmem:[#allocation2 + $0x8] sm:$0xff]
        %v671 = vld [vmem:[#allocation2 + $0x10] sm:$0xff]
        %v672 = vld [vmem:[#allocation2 + $0x18] sm:$0xff]
        %v673 = vld [vmem:[#allocation2 + $0x20] sm:$0xff]
        %v674 = vld [vmem:[#allocation2 + $0x28] sm:$0xff]
        %v675 = vld [vmem:[#allocation2 + $0x30] sm:$0xff]
        %v676 = vld [vmem:[#allocation2 + $0x38] sm:$0xff]
        %v677 = vld [vmem:[#allocation2 + $0x40] sm:$0xff]
        %v678 = vld [vmem:[#allocation2 + $0x48] sm:$0xff]
        %v679 = vld [vmem:[#allocation2 + $0x50] sm:$0xff]
        %v680 = vld [vmem:[#allocation2 + $0x58] sm:$0xff]
        %v681 = vld [vmem:[#allocation2 + $0x60] sm:$0xff]
        %v682 = vld [vmem:[#allocation2 + $0x68] sm:$0xff]
        %v683 = vld [vmem:[#allocation2 + $0x70] sm:$0xff]
        %v684 = vld [vmem:[#allocation2 + $0x78] sm:$0xff]
        %v685 = vld [vmem:[%s268] sm:$0xff]
        %v686 = vld [vmem:[%s268 + $0x8] sm:$0xff]
        %v687 = vld [vmem:[%s268 + $0x10] sm:$0xff]
        %v688 = vld [vmem:[%s268 + $0x18] sm:$0xff]
        %v689 = vld [vmem:[%s268 + $0x20] sm:$0xff]
        %v690 = vld [vmem:[%s268 + $0x28] sm:$0xff]
        %v691 = vld [vmem:[%s268 + $0x30] sm:$0xff]
        %v692 = vld [vmem:[%s268 + $0x38] sm:$0xff]
        %v693 = vld [vmem:[%s268 + $0x40] sm:$0xff]
        %v694 = vld [vmem:[%s268 + $0x48] sm:$0xff]
        %v695 = vld [vmem:[%s268 + $0x50] sm:$0xff]
        %v696 = vld [vmem:[%s268 + $0x58] sm:$0xff]
        %v697 = vld [vmem:[%s268 + $0x60] sm:$0xff]
        %v698 = vld [vmem:[%s268 + $0x68] sm:$0xff]
        %v699 = vld [vmem:[%s268 + $0x70] sm:$0xff]
        %v700 = vld [vmem:[%s268 + $0x78] sm:$0xff]
        %v701 = vld [vmem:[%s3] sm:$0x1]
        %703 = vset.pattern.permute.xlu0 0
        %704 = vperm.xlu0 %703, %v685
        %v705 = vpop.permute.xlu0 %704
        %708 = vset.pattern.permute.xlu0 0
        %709 = vperm.xlu0 %708, %v686
        %v710 = vpop.permute.xlu0 %709
        %713 = vset.pattern.permute.xlu0 0
        %714 = vperm.xlu0 %713, %v687
        %v715 = vpop.permute.xlu0 %714
        %718 = vset.pattern.permute.xlu0 0
        %719 = vperm.xlu0 %718, %v688
        %v720 = vpop.permute.xlu0 %719
        %723 = vset.pattern.permute.xlu0 0
        %724 = vperm.xlu0 %723, %v689
        %v725 = vpop.permute.xlu0 %724
        %728 = vset.pattern.permute.xlu0 0
        %729 = vperm.xlu0 %728, %v690
        %v730 = vpop.permute.xlu0 %729
        %733 = vset.pattern.permute.xlu0 0
        %734 = vperm.xlu0 %733, %v691
        %v735 = vpop.permute.xlu0 %734
        %738 = vset.pattern.permute.xlu0 0
        %739 = vperm.xlu0 %738, %v692
        %v740 = vpop.permute.xlu0 %739
        %743 = vset.pattern.permute.xlu0 0
        %744 = vperm.xlu0 %743, %v693
        %v745 = vpop.permute.xlu0 %744
        %748 = vset.pattern.permute.xlu0 0
        %749 = vperm.xlu0 %748, %v694
        %v750 = vpop.permute.xlu0 %749
        %753 = vset.pattern.permute.xlu0 0
        %754 = vperm.xlu0 %753, %v695
        %v755 = vpop.permute.xlu0 %754
        %758 = vset.pattern.permute.xlu0 0
        %759 = vperm.xlu0 %758, %v696
        %v760 = vpop.permute.xlu0 %759
        %763 = vset.pattern.permute.xlu0 0
        %764 = vperm.xlu0 %763, %v697
        %v765 = vpop.permute.xlu0 %764
        %768 = vset.pattern.permute.xlu0 0
        %769 = vperm.xlu0 %768, %v698
        %v770 = vpop.permute.xlu0 %769
        %773 = vset.pattern.permute.xlu0 0
        %774 = vperm.xlu0 %773, %v699
        %v775 = vpop.permute.xlu0 %774
        %778 = vset.pattern.permute.xlu0 0
        %779 = vperm.xlu0 %778, %v700
        %v780 = vpop.permute.xlu0 %779
        %v783 = vlaneseq
        %v784 = vshrl.u32 %v783, 7
        %v785 = vsub.s32 0, %v784
        %v786 = vrot.slane %v701, %v785
        %v788 = vmul.f32 %v705, %v786
        %v789 = vmul.f32 %v710, %v786
        %v790 = vmul.f32 %v715, %v786
        %v791 = vmul.f32 %v720, %v786
        %v792 = vmul.f32 %v725, %v786
        %v793 = vmul.f32 %v730, %v786
        %v794 = vmul.f32 %v735, %v786
        %v795 = vmul.f32 %v740, %v786
        %v796 = vmul.f32 %v745, %v786
        %v797 = vmul.f32 %v750, %v786
        %v798 = vmul.f32 %v755, %v786
        %v799 = vmul.f32 %v760, %v786
        %v800 = vmul.f32 %v765, %v786
        %v801 = vmul.f32 %v770, %v786
        %v802 = vmul.f32 %v775, %v786
        %v803 = vmul.f32 %v780, %v786
        %v804 = vadd.f32 %v669, %v788
        %v805 = vadd.f32 %v670, %v789
        %v806 = vadd.f32 %v671, %v790
        %v807 = vadd.f32 %v672, %v791
        %v808 = vadd.f32 %v673, %v792
        %v809 = vadd.f32 %v674, %v793
        %v810 = vadd.f32 %v675, %v794
        %v811 = vadd.f32 %v676, %v795
        %v812 = vadd.f32 %v677, %v796
        %v813 = vadd.f32 %v678, %v797
        %v814 = vadd.f32 %v679, %v798
        %v815 = vadd.f32 %v680, %v799
        %v816 = vadd.f32 %v681, %v800
        %v817 = vadd.f32 %v682, %v801
        %v818 = vadd.f32 %v683, %v802
        %v819 = vadd.f32 %v684, %v803
        %v820 = vmax.f32 %v804, 0.0
        %v821 = vmax.f32 %v805, 0.0
        %v822 = vmax.f32 %v806, 0.0
        %v823 = vmax.f32 %v807, 0.0
        %v824 = vmax.f32 %v808, 0.0
        %v825 = vmax.f32 %v809, 0.0
        %v826 = vmax.f32 %v810, 0.0
        %v827 = vmax.f32 %v811, 0.0
        %v828 = vmax.f32 %v812, 0.0
        %v829 = vmax.f32 %v813, 0.0
        %v830 = vmax.f32 %v814, 0.0
        %v831 = vmax.f32 %v815, 0.0
        %v832 = vmax.f32 %v816, 0.0
        %v833 = vmax.f32 %v817, 0.0
        %v834 = vmax.f32 %v818, 0.0
        %v835 = vmax.f32 %v819, 0.0
        %v836 = vpack.c.bf16 %v821, %v820
        %v837 = vpack.c.bf16 %v823, %v822
        %v838 = vpack.c.bf16 %v825, %v824
        %v839 = vpack.c.bf16 %v827, %v826
        %v840 = vpack.c.bf16 %v829, %v828
        %v841 = vpack.c.bf16 %v831, %v830
        %v842 = vpack.c.bf16 %v833, %v832
        %v843 = vpack.c.bf16 %v835, %v834
        %v852 = vunpack.c.l.b16 %v836
        %v853 = vunpack.c.h.b16 %v836
        %v854 = vunpack.c.l.b16 %v837
        %v855 = vunpack.c.h.b16 %v837
        %v856 = vunpack.c.l.b16 %v838
        %v857 = vunpack.c.h.b16 %v838
        %v858 = vunpack.c.l.b16 %v839
        %v859 = vunpack.c.h.b16 %v839
        %v860 = vunpack.c.l.b16 %v840
        %v861 = vunpack.c.h.b16 %v840
        %v862 = vunpack.c.l.b16 %v841
        %v863 = vunpack.c.h.b16 %v841
        %v864 = vunpack.c.l.b16 %v842
        %v865 = vunpack.c.h.b16 %v842
        %v866 = vunpack.c.l.b16 %v843
        %v867 = vunpack.c.h.b16 %v843
        %v868 = vpack.c.b16 %v852, %v852
        %v869 = vpack.c.b16 %v853, %v853
        %v870 = vpack.c.b16 %v854, %v854
        %v871 = vpack.c.b16 %v855, %v855
        %v872 = vpack.c.b16 %v856, %v856
        %v873 = vpack.c.b16 %v857, %v857
        %v874 = vpack.c.b16 %v858, %v858
        %v875 = vpack.c.b16 %v859, %v859
        %v876 = vpack.c.b16 %v860, %v860
        %v877 = vpack.c.b16 %v861, %v861
        %v878 = vpack.c.b16 %v862, %v862
        %v879 = vpack.c.b16 %v863, %v863
        %v880 = vpack.c.b16 %v864, %v864
        %v881 = vpack.c.b16 %v865, %v865
        %v882 = vpack.c.b16 %v866, %v866
        %v883 = vpack.c.b16 %v867, %v867
        %900 = vst [vmem:[%s274] sm:$0xf] %v868
        %901 = vst [vmem:[%s274 + $0x4] sm:$0xf] %v869
        %902 = vst [vmem:[%s274 + $0x8] sm:$0xf] %v870
        %903 = vst [vmem:[%s274 + $0xc] sm:$0xf] %v871
        %904 = vst [vmem:[%s274 + $0x10] sm:$0xf] %v872
        %905 = vst [vmem:[%s274 + $0x14] sm:$0xf] %v873
        %906 = vst [vmem:[%s274 + $0x18] sm:$0xf] %v874
        %907 = vst [vmem:[%s274 + $0x1c] sm:$0xf] %v875
        %908 = vst [vmem:[%s274 + $0x20] sm:$0xf] %v876
        %909 = vst [vmem:[%s274 + $0x24] sm:$0xf] %v877
        %910 = vst [vmem:[%s274 + $0x28] sm:$0xf] %v878
        %911 = vst [vmem:[%s274 + $0x2c] sm:$0xf] %v879
        %912 = vst [vmem:[%s274 + $0x30] sm:$0xf] %v880
        %913 = vst [vmem:[%s274 + $0x34] sm:$0xf] %v881
        %914 = vst [vmem:[%s274 + $0x38] sm:$0xf] %v882
        %915 = vst [vmem:[%s274 + $0x3c] sm:$0xf] %v883
      $region44: #{gcn_forward_pallas.5} parent=35 // pred_fallthru
        _
      %s916 = smul.u32 16, %s19
      %p917 = scmp.lt.s32.totalorder %s916, 31
      %s918 = scalar_select %p917, %s916, 31
      %s919 = smul.addr %s918, 4
      %s920 = scalar_lea.vmem %s4, %s919
      // Predicated region
      $region45: #{gcn_forward_pallas.5} parent=35 // pred_check
        %p921 = pneg %p146
      $region46: #{gcn_forward_pallas.5} parent=35 // pred_check_branch
        %923 = sbr.rel (%p921) target = $region48
      $region47: #{gcn_forward_pallas.5} parent=35 // pred_region
        %s924 = smul.u32 16, %s19
      $region48: #{gcn_forward_pallas.5} parent=35 // pred_fallthru
        _
    $region36: #{gcn_forward_pallas.5} parent=5 // pred_fallthru
      _
    %p925 = scmp.le.s32.totalorder 2, %s10
    // Predicated region
    $region49: #{gcn_forward_pallas.5} parent=5 // pred_check
      %p926 = pneg %p925
    $region50: #{gcn_forward_pallas.5} parent=5 // pred_check_branch
      %928 = sbr.rel (%p926) target = $region52
    $region51: #{gcn_forward_pallas.5} parent=5 // pred_region
      %s929 = ssub.s32 %s10, 2
      // Predicated region
      $region53: #{gcn_forward_pallas.5} parent=51 // pred_check
        %p930 = pneg %p152
      $region54: #{gcn_forward_pallas.5} parent=51 // pred_check_branch
        %932 = sbr.rel (%p930) target = $region56
      $region55: #{gcn_forward_pallas.5} parent=51 // pred_region
        %s933 = smul.u32 16, %s21
        %p934 = scmp.lt.s32.totalorder %s933, 31
        %s935 = scalar_select %p934, %s933, 31
        %s936 = smul.addr %s935, 4
        %s937 = scalar_lea.vmem %s4, %s936
      $region56: #{gcn_forward_pallas.5} parent=51 // pred_fallthru
        _
    $region52: #{gcn_forward_pallas.5} parent=5 // pred_fallthru
      _
  $region6: #{gcn_forward_pallas.5} parent=0 // loop_footer
    %s14 = sadd.s32 1, %s10
  $region7: #{gcn_forward_pallas.5} parent=0 // loop_footer_branch
    %9 = sbr.rel target = $region3
  $region8: #{gcn_forward_pallas.5} parent=0 // loop_exit
    _

// kernel: gcn_forward_pallas.7
$region0: #{gcn_forward_pallas.7}
  #allocation0 [shape = 'u32[]', space=smem, size = 0x4, offset = 0x4, fixed_abs, tag = 'smem constant byte address 0x4 - core index']
  #allocation1 [shape = 'u32[144,128]{1,0:T(1,128)}', space=vmem, size = 0x12000, scoped, tag = 'internal scratch']
  #allocation2 [shape = 'f32[128,128]{1,0:T(8,128)}', space=vmem, size = 0x10000, scoped, tag = 'scratch operand']
  %s0 = inlined_call_operand.vmem [shape: bf16[256,256], index: 0, kind: input, shape index: {}]
  %s1 = inlined_call_operand.vmem [shape: bf16[256,128], index: 1, kind: input, shape index: {}]
  %s2 = inlined_call_operand.vmem [shape: f32[256,1], index: 2, kind: input, shape index: {}]
  %s3 = inlined_call_operand.vmem [shape: f32[1,128], index: 3, kind: input, shape index: {}]
  %s4 = inlined_call_operand.vmem [shape: f32[256,128], index: 4, kind: output, shape index: {}]
  %s5 = sld [smem:[#allocation0]]
  $region57: #{gcn_forward_pallas.7} parent=0
    _
  %s7 = ssub.s32 1, %s5
  %s8 = scalar_select 0, %s7, %s5
  loop: start=0, step=1, limit=4
  $region2: #{gcn_forward_pallas.7} parent=0 // loop_pre_header
    _
  $region3: #{gcn_forward_pallas.7} parent=0 // loop_header
    %s10 = sphi 0, %s14
    %p11 = scmp.ge.s32.totalorder %s10, 4
    %s17 = sphi 0, %s29
    %s18 = sphi 0, %s25
    %s19 = sphi 0, %s17
    %s20 = sphi 0, %s18
    %s21 = sphi 0, %s19
    %s22 = sphi 0, %s20
    %s34 = sphi 0, %s36
    %s37 = sphi 0, %s34
    %s38 = sphi 0, %s37
    %s54 = sphi 0, %s38
    %s60 = sphi 0, %s62
    %s63 = sphi 0, %s60
    %s64 = sphi 0, %s63
    %s80 = sphi 0, %s64
    %s86 = sphi 0, %s88
    %s89 = sphi 0, %s86
    %s90 = sphi 0, %s89
    %s106 = sphi 0, %s90
    %s110 = sphi 0, %s110
    %s112 = sphi 0, %s110
    %s113 = sphi 0, %s112
    %s127 = sphi 0, %s113
    %s133 = sphi 0, %s135
    %s136 = sphi 0, %s133
    %s137 = sphi 0, %s136
    %s153 = sphi 0, %s137
  $region4: #{gcn_forward_pallas.7} parent=0 // loop_header_branch
    %13 = sbr.rel (%p11) target = $region8
  $region5: #{gcn_forward_pallas.7} parent=0 // loop_body
    %s15 = ssub.s32 %s10, 1
    %s16 = ssub.s32 %s10, 2
    %s23 = sadd.s32 1, %s18
    %p24 = scmp.ge.s32.totalorder %s23, 1
    %s25 = scalar_select %p24, 0, %s23
    %s26 = sadd.s32 1, %s17
    %s27 = scalar_select %p24, %s26, %s17
    %p28 = scmp.ge.s32.totalorder %s27, 2
    %s29 = scalar_select %p28, 0, %s27
    %s30 = ssub.s32 %s17, %s29
    %s31 = ssub.s32 %s18, %s25
    %s32 = sor.u32 %s30, %s31
    %p33 = scmp.eq.s32.totalorder %s32, 0
    %s35 = sadd.s32 %s34, 1
    %s36 = scalar_select %p33, %s34, %s35
    %p39 = pneg %p33
    %p40 = scmp.eq.s32.totalorder %s10, 1
    %p41 = por %p39, %p40
    %p42 = scmp.ne.s32.totalorder %s34, %s37
    %p43 = scmp.eq.s32.totalorder %s10, 0
    %p44 = por %p42, %p43
    %p45 = scmp.ne.s32.totalorder %s34, %s37
    %p46 = scmp.eq.s32.totalorder %s15, 1
    %p47 = por %p45, %p46
    %p48 = scmp.ne.s32.totalorder %s37, %s38
    %p49 = scmp.eq.s32.totalorder %s15, 0
    %p50 = por %p48, %p49
    %p51 = scmp.ne.s32.totalorder %s37, %s38
    %p52 = scmp.eq.s32.totalorder %s16, 1
    %p53 = por %p51, %p52
    %p55 = scmp.ne.s32.totalorder %s38, %s54
    %p56 = scmp.eq.s32.totalorder %s16, 0
    %p57 = por %p55, %p56
    %s58 = ssub.s32 %s18, %s25
    %p59 = scmp.eq.s32.totalorder %s58, 0
    %s61 = sadd.s32 %s60, 1
    %s62 = scalar_select %p59, %s60, %s61
    %p65 = pneg %p59
    %p66 = scmp.eq.s32.totalorder %s10, 1
    %p67 = por %p65, %p66
    %p68 = scmp.ne.s32.totalorder %s60, %s63
    %p69 = scmp.eq.s32.totalorder %s10, 0
    %p70 = por %p68, %p69
    %p71 = scmp.ne.s32.totalorder %s60, %s63
    %p72 = scmp.eq.s32.totalorder %s15, 1
    %p73 = por %p71, %p72
    %p74 = scmp.ne.s32.totalorder %s63, %s64
    %p75 = scmp.eq.s32.totalorder %s15, 0
    %p76 = por %p74, %p75
    %p77 = scmp.ne.s32.totalorder %s63, %s64
    %p78 = scmp.eq.s32.totalorder %s16, 1
    %p79 = por %p77, %p78
    %p81 = scmp.ne.s32.totalorder %s64, %s80
    %p82 = scmp.eq.s32.totalorder %s16, 0
    %p83 = por %p81, %p82
    %s84 = ssub.s32 %s17, %s29
    %p85 = scmp.eq.s32.totalorder %s84, 0
    %s87 = sadd.s32 %s86, 1
    %s88 = scalar_select %p85, %s86, %s87
    %p91 = pneg %p85
    %p92 = scmp.eq.s32.totalorder %s10, 1
    %p93 = por %p91, %p92
    %p94 = scmp.ne.s32.totalorder %s86, %s89
    %p95 = scmp.eq.s32.totalorder %s10, 0
    %p96 = por %p94, %p95
    %p97 = scmp.ne.s32.totalorder %s86, %s89
    %p98 = scmp.eq.s32.totalorder %s15, 1
    %p99 = por %p97, %p98
    %p100 = scmp.ne.s32.totalorder %s89, %s90
    %p101 = scmp.eq.s32.totalorder %s15, 0
    %p102 = por %p100, %p101
    %p103 = scmp.ne.s32.totalorder %s89, %s90
    %p104 = scmp.eq.s32.totalorder %s16, 1
    %p105 = por %p103, %p104
    %p107 = scmp.ne.s32.totalorder %s90, %s106
    %p108 = scmp.eq.s32.totalorder %s16, 0
    %p109 = por %p107, %p108
    %s111 = sadd.s32 %s110, 1
    %p114 = scmp.eq.s32.totalorder %s10, 1
    %p115 = scmp.ne.s32.totalorder %s110, %s112
    %p116 = scmp.eq.s32.totalorder %s10, 0
    %p117 = por %p115, %p116
    %p118 = scmp.ne.s32.totalorder %s110, %s112
    %p119 = scmp.eq.s32.totalorder %s15, 1
    %p120 = por %p118, %p119
    %p121 = scmp.ne.s32.totalorder %s112, %s113
    %p122 = scmp.eq.s32.totalorder %s15, 0
    %p123 = por %p121, %p122
    %p124 = scmp.ne.s32.totalorder %s112, %s113
    %p125 = scmp.eq.s32.totalorder %s16, 1
    %p126 = por %p124, %p125
    %p128 = scmp.ne.s32.totalorder %s113, %s127
    %p129 = scmp.eq.s32.totalorder %s16, 0
    %p130 = por %p128, %p129
    %s131 = ssub.s32 %s17, %s29
    %p132 = scmp.eq.s32.totalorder %s131, 0
    %s134 = sadd.s32 %s133, 1
    %s135 = scalar_select %p132, %s133, %s134
    %p138 = pneg %p132
    %p139 = scmp.eq.s32.totalorder %s10, 1
    %p140 = por %p138, %p139
    %p141 = scmp.ne.s32.totalorder %s133, %s136
    %p142 = scmp.eq.s32.totalorder %s10, 0
    %p143 = por %p141, %p142
    %p144 = scmp.ne.s32.totalorder %s133, %s136
    %p145 = scmp.eq.s32.totalorder %s15, 1
    %p146 = por %p144, %p145
    %p147 = scmp.ne.s32.totalorder %s136, %s137
    %p148 = scmp.eq.s32.totalorder %s15, 0
    %p149 = por %p147, %p148
    %p150 = scmp.ne.s32.totalorder %s136, %s137
    %p151 = scmp.eq.s32.totalorder %s16, 1
    %p152 = por %p150, %p151
    %p154 = scmp.ne.s32.totalorder %s137, %s153
    %p155 = scmp.eq.s32.totalorder %s16, 0
    %p156 = por %p154, %p155
    %p157 = scmp.le.s32.totalorder 1, %s10
    %p158 = scmp.lt.s32.totalorder %s10, 3
    %p159 = pnand %p157, %p158
    %p160 = pneg %p159
    // Predicated region
    $region9: #{gcn_forward_pallas.7} parent=5 // pred_check
      _
    $region10: #{gcn_forward_pallas.7} parent=5 // pred_check_branch
      %162 = sbr.rel (%p159) target = $region12
    $region11: #{gcn_forward_pallas.7} parent=5 // pred_region
      %s163 = ssub.s32 %s10, 1
      // Predicated region
      $region13: #{gcn_forward_pallas.7} parent=11 // pred_check
        %p164 = pneg %p76
      $region14: #{gcn_forward_pallas.7} parent=11 // pred_check_branch
        %166 = sbr.rel (%p164) target = $region16
      $region15: #{gcn_forward_pallas.7} parent=11 // pred_region
        %s167 = smul.u32 32, %s20
        %p168 = scmp.lt.s32.totalorder %s167, 31
        %s169 = scalar_select %p168, %s167, 31
        %s170 = smul.addr %s169, 4
        %s171 = scalar_lea.vmem %s1, %s170
        %s172 = smul.u32 32, %s20
      $region16: #{gcn_forward_pallas.7} parent=11 // pred_fallthru
        _
      // Predicated region
      $region17: #{gcn_forward_pallas.7} parent=11 // pred_check
        %p173 = pneg %p123
      $region18: #{gcn_forward_pallas.7} parent=11 // pred_check_branch
        %175 = sbr.rel (%p173) target = $region20
      $region19: #{gcn_forward_pallas.7} parent=11 // pred_region
        _
      $region20: #{gcn_forward_pallas.7} parent=11 // pred_fallthru
        _
    $region12: #{gcn_forward_pallas.7} parent=5 // pred_fallthru
      _
    %p176 = scmp.lt.s32.totalorder %s10, 2
    // Predicated region
    $region21: #{gcn_forward_pallas.7} parent=5 // pred_check
      %p177 = pneg %p176
    $region22: #{gcn_forward_pallas.7} parent=5 // pred_check_branch
      %179 = sbr.rel (%p177) target = $region24
    $region23: #{gcn_forward_pallas.7} parent=5 // pred_region
      // Predicated region
      $region25: #{gcn_forward_pallas.7} parent=23 // pred_check
        %p180 = pneg %p44
      $region26: #{gcn_forward_pallas.7} parent=23 // pred_check_branch
        %182 = sbr.rel (%p180) target = $region28
      $region27: #{gcn_forward_pallas.7} parent=23 // pred_region
        %s183 = smul.u32 16, %s17
        %s184 = smul.u32 2, %s18
        %p185 = scmp.lt.s32.totalorder %s183, 31
        %s186 = scalar_select %p185, %s183, 31
        %p187 = scmp.lt.s32.totalorder %s184, 1
        %s188 = scalar_select %p187, %s184, 1
        %s189 = smul.addr %s186, 2
        %s190 = sadd.s32 %s188, %s189
        %s191 = smul.addr %s190, 4
        %s192 = scalar_lea.vmem %s0, %s191
        %s193 = smul.u32 16, %s17
        %s194 = smul.u32 2, %s18
      $region28: #{gcn_forward_pallas.7} parent=23 // pred_fallthru
        _
      // Predicated region
      $region29: #{gcn_forward_pallas.7} parent=23 // pred_check
        %p195 = pneg %p96
      $region30: #{gcn_forward_pallas.7} parent=23 // pred_check_branch
        %197 = sbr.rel (%p195) target = $region32
      $region31: #{gcn_forward_pallas.7} parent=23 // pred_region
        %s198 = smul.u32 16, %s17
        %p199 = scmp.lt.s32.totalorder %s198, 31
        %s200 = scalar_select %p199, %s198, 31
        %s201 = smul.addr %s200, 8
        %s202 = scalar_lea.vmem %s2, %s201
        %s203 = smul.u32 16, %s17
      $region32: #{gcn_forward_pallas.7} parent=23 // pred_fallthru
        _
    $region24: #{gcn_forward_pallas.7} parent=5 // pred_fallthru
      _
    %p204 = scmp.le.s32.totalorder 1, %s10
    %p205 = scmp.lt.s32.totalorder %s10, 3
    %p206 = pnand %p204, %p205
    %p207 = pneg %p206
    // Predicated region
    $region33: #{gcn_forward_pallas.7} parent=5 // pred_check
      _
    $region34: #{gcn_forward_pallas.7} parent=5 // pred_check_branch
      %209 = sbr.rel (%p206) target = $region36
    $region35: #{gcn_forward_pallas.7} parent=5 // pred_region
      %s210 = ssub.s32 %s10, 1
      %s211 = smul.u32 16, %s19
      %s212 = smul.u32 2, %s20
      %p213 = scmp.lt.s32.totalorder %s211, 31
      %s214 = scalar_select %p213, %s211, 31
      %p215 = scmp.lt.s32.totalorder %s212, 1
      %s216 = scalar_select %p215, %s212, 1
      %s217 = smul.addr %s214, 2
      %s218 = sadd.s32 %s216, %s217
      %s219 = smul.addr %s218, 4
      %s220 = scalar_lea.vmem %s0, %s219
      %p221 = pneg %p50
      %p222 = pneg %p47
      %s223 = smul.u32 32, %s20
      %p224 = scmp.lt.s32.totalorder %s223, 31
      %s225 = scalar_select %p224, %s223, 31
      %s226 = smul.addr %s225, 4
      %s227 = scalar_lea.vmem %s1, %s226
      %p228 = pneg %p76
      %p229 = pneg %p73
      %s230 = smul.u32 16, %s19
      %p231 = scmp.lt.s32.totalorder %s230, 31
      %s232 = scalar_select %p231, %s230, 31
      %s233 = smul.addr %s232, 8
      %s234 = scalar_lea.vmem %s2, %s233
      %p235 = pneg %p102
      %p236 = pneg %p99
      %p237 = pneg %p123
      %p238 = pneg %p120
      %p239 = pneg %p149
      %p240 = pneg %p146
      %s241 = smul.u32 16, %s19
      %p242 = scmp.lt.s32.totalorder %s241, 31
      %s243 = scalar_select %p242, %s241, 31
      %s244 = smul.addr %s243, 8
      %s245 = scalar_lea.vmem %s4, %s244
      %s246 = smul.u32 16, %s19
      %s247 = smul.u32 2, %s20
      %p248 = scmp.lt.s32.totalorder %s246, 31
      %s249 = scalar_select %p248, %s246, 31
      %p250 = scmp.lt.s32.totalorder %s247, 1
      %s251 = scalar_select %p250, %s247, 1
      %s252 = smul.addr %s249, 2
      %s253 = sadd.s32 %s251, %s252
      %s254 = smul.addr %s253, 4
      %s255 = scalar_lea.vmem %s0, %s254
      %s256 = smul.u32 16, %s19
      %s257 = smul.u32 2, %s20
      %s258 = smul.u32 32, %s20
      %p259 = scmp.lt.s32.totalorder %s258, 31
      %s260 = scalar_select %p259, %s258, 31
      %s261 = smul.addr %s260, 4
      %s262 = scalar_lea.vmem %s1, %s261
      %s263 = smul.u32 32, %s20
      %s264 = smul.u32 16, %s19
      %p265 = scmp.lt.s32.totalorder %s264, 31
      %s266 = scalar_select %p265, %s264, 31
      %s267 = smul.addr %s266, 8
      %s268 = scalar_lea.vmem %s2, %s267
      %s269 = smul.u32 16, %s19
      %s270 = smul.u32 16, %s19
      %p271 = scmp.lt.s32.totalorder %s270, 31
      %s272 = scalar_select %p271, %s270, 31
      %s273 = smul.addr %s272, 8
      %s274 = scalar_lea.vmem %s4, %s273
      %s275 = smul.u32 16, %s19
      %p277 = scmp.eq.s32.totalorder %s20, 0
      // Predicated region
      $region37: #{gcn_forward_pallas.7} parent=35 // pred_check
        %p278 = pneg %p277
      $region38: #{gcn_forward_pallas.7} parent=35 // pred_check_branch
        %280 = sbr.rel (%p278) target = $region40
      $region39: #{gcn_forward_pallas.7} parent=35 // pred_region
        %281 = vst [vmem:[#allocation2] sm:$0xff] 0.0
        %282 = vst [vmem:[#allocation2 + $0x8] sm:$0xff] 0.0
        %283 = vst [vmem:[#allocation2 + $0x10] sm:$0xff] 0.0
        %284 = vst [vmem:[#allocation2 + $0x18] sm:$0xff] 0.0
        %285 = vst [vmem:[#allocation2 + $0x20] sm:$0xff] 0.0
        %286 = vst [vmem:[#allocation2 + $0x28] sm:$0xff] 0.0
        %287 = vst [vmem:[#allocation2 + $0x30] sm:$0xff] 0.0
        %288 = vst [vmem:[#allocation2 + $0x38] sm:$0xff] 0.0
        %289 = vst [vmem:[#allocation2 + $0x40] sm:$0xff] 0.0
        %290 = vst [vmem:[#allocation2 + $0x48] sm:$0xff] 0.0
        %291 = vst [vmem:[#allocation2 + $0x50] sm:$0xff] 0.0
        %292 = vst [vmem:[#allocation2 + $0x58] sm:$0xff] 0.0
        %293 = vst [vmem:[#allocation2 + $0x60] sm:$0xff] 0.0
        %294 = vst [vmem:[#allocation2 + $0x68] sm:$0xff] 0.0
        %295 = vst [vmem:[#allocation2 + $0x70] sm:$0xff] 0.0
        %296 = vst [vmem:[#allocation2 + $0x78] sm:$0xff] 0.0
      $region40: #{gcn_forward_pallas.7} parent=35 // pred_fallthru
        _
      %v297 = vld [vmem:[#allocation2] sm:$0xff]
      %v298 = vld [vmem:[#allocation2 + $0x8] sm:$0xff]
      %v299 = vld [vmem:[#allocation2 + $0x10] sm:$0xff]
      %v300 = vld [vmem:[#allocation2 + $0x18] sm:$0xff]
      %v301 = vld [vmem:[#allocation2 + $0x20] sm:$0xff]
      %v302 = vld [vmem:[#allocation2 + $0x28] sm:$0xff]
      %v303 = vld [vmem:[#allocation2 + $0x30] sm:$0xff]
      %v304 = vld [vmem:[#allocation2 + $0x38] sm:$0xff]
      %v305 = vld [vmem:[#allocation2 + $0x40] sm:$0xff]
      %v306 = vld [vmem:[#allocation2 + $0x48] sm:$0xff]
      %v307 = vld [vmem:[#allocation2 + $0x50] sm:$0xff]
      %v308 = vld [vmem:[#allocation2 + $0x58] sm:$0xff]
      %v309 = vld [vmem:[#allocation2 + $0x60] sm:$0xff]
      %v310 = vld [vmem:[#allocation2 + $0x68] sm:$0xff]
      %v311 = vld [vmem:[#allocation2 + $0x70] sm:$0xff]
      %v312 = vld [vmem:[#allocation2 + $0x78] sm:$0xff]
      %v313 = vld [vmem:[%s255] sm:$0xff]
      %v314 = vld [vmem:[%s255 + $0x8] sm:$0xff]
      %v315 = vld [vmem:[%s255 + $0x10] sm:$0xff]
      %v316 = vld [vmem:[%s255 + $0x18] sm:$0xff]
      %v317 = vld [vmem:[%s255 + $0x20] sm:$0xff]
      %v318 = vld [vmem:[%s255 + $0x28] sm:$0xff]
      %v319 = vld [vmem:[%s255 + $0x30] sm:$0xff]
      %v320 = vld [vmem:[%s255 + $0x38] sm:$0xff]
      %v321 = vld [vmem:[%s255 + $0x40] sm:$0xff]
      %v322 = vld [vmem:[%s255 + $0x48] sm:$0xff]
      %v323 = vld [vmem:[%s255 + $0x50] sm:$0xff]
      %v324 = vld [vmem:[%s255 + $0x58] sm:$0xff]
      %v325 = vld [vmem:[%s255 + $0x60] sm:$0xff]
      %v326 = vld [vmem:[%s255 + $0x68] sm:$0xff]
      %v327 = vld [vmem:[%s255 + $0x70] sm:$0xff]
      %v328 = vld [vmem:[%s255 + $0x78] sm:$0xff]
      %v329 = vld [vmem:[%s262] sm:$0xf]
      %v330 = vld [vmem:[%s262 + $0x4] sm:$0xf]
      %v331 = vld [vmem:[%s262 + $0x8] sm:$0xf]
      %v332 = vld [vmem:[%s262 + $0xc] sm:$0xf]
      %v333 = vld [vmem:[%s262 + $0x10] sm:$0xf]
      %v334 = vld [vmem:[%s262 + $0x14] sm:$0xf]
      %v335 = vld [vmem:[%s262 + $0x18] sm:$0xf]
      %v336 = vld [vmem:[%s262 + $0x1c] sm:$0xf]
      %v337 = vld [vmem:[%s262 + $0x20] sm:$0xf]
      %v338 = vld [vmem:[%s262 + $0x24] sm:$0xf]
      %v339 = vld [vmem:[%s262 + $0x28] sm:$0xf]
      %v340 = vld [vmem:[%s262 + $0x2c] sm:$0xf]
      %v341 = vld [vmem:[%s262 + $0x30] sm:$0xf]
      %v342 = vld [vmem:[%s262 + $0x34] sm:$0xf]
      %v343 = vld [vmem:[%s262 + $0x38] sm:$0xf]
      %v344 = vld [vmem:[%s262 + $0x3c] sm:$0xf]
      %v345 = vld [vmem:[%s262 + $0x40] sm:$0xf]
      %v346 = vld [vmem:[%s262 + $0x44] sm:$0xf]
      %v347 = vld [vmem:[%s262 + $0x48] sm:$0xf]
      %v348 = vld [vmem:[%s262 + $0x4c] sm:$0xf]
      %v349 = vld [vmem:[%s262 + $0x50] sm:$0xf]
      %v350 = vld [vmem:[%s262 + $0x54] sm:$0xf]
      %v351 = vld [vmem:[%s262 + $0x58] sm:$0xf]
      %v352 = vld [vmem:[%s262 + $0x5c] sm:$0xf]
      %v353 = vld [vmem:[%s262 + $0x60] sm:$0xf]
      %v354 = vld [vmem:[%s262 + $0x64] sm:$0xf]
      %v355 = vld [vmem:[%s262 + $0x68] sm:$0xf]
      %v356 = vld [vmem:[%s262 + $0x6c] sm:$0xf]
      %v357 = vld [vmem:[%s262 + $0x70] sm:$0xf]
      %v358 = vld [vmem:[%s262 + $0x74] sm:$0xf]
      %v359 = vld [vmem:[%s262 + $0x78] sm:$0xf]
      %v360 = vld [vmem:[%s262 + $0x7c] sm:$0xf]
      %v377 = vunpack.c.l.b16 %v313
      %v378 = vunpack.c.h.b16 %v313
      %v379 = vunpack.c.l.b16 %v314
      %v380 = vunpack.c.h.b16 %v314
      %v381 = vunpack.c.l.b16 %v315
      %v382 = vunpack.c.h.b16 %v315
      %v383 = vunpack.c.l.b16 %v316
      %v384 = vunpack.c.h.b16 %v316
      %v385 = vunpack.c.l.b16 %v317
      %v386 = vunpack.c.h.b16 %v317
      %v387 = vunpack.c.l.b16 %v318
      %v388 = vunpack.c.h.b16 %v318
      %v389 = vunpack.c.l.b16 %v319
      %v390 = vunpack.c.h.b16 %v319
      %v391 = vunpack.c.l.b16 %v320
      %v392 = vunpack.c.h.b16 %v320
      %v393 = vunpack.c.l.b16 %v321
      %v394 = vunpack.c.h.b16 %v321
      %v395 = vunpack.c.l.b16 %v322
      %v396 = vunpack.c.h.b16 %v322
      %v397 = vunpack.c.l.b16 %v323
      %v398 = vunpack.c.h.b16 %v323
      %v399 = vunpack.c.l.b16 %v324
      %v400 = vunpack.c.h.b16 %v324
      %v401 = vunpack.c.l.b16 %v325
      %v402 = vunpack.c.h.b16 %v325
      %v403 = vunpack.c.l.b16 %v326
      %v404 = vunpack.c.h.b16 %v326
      %v405 = vunpack.c.l.b16 %v327
      %v406 = vunpack.c.h.b16 %v327
      %v407 = vunpack.c.l.b16 %v328
      %v408 = vunpack.c.h.b16 %v328
      %v409 = vpack.c.b16 %v379, %v377
      %v410 = vpack.c.b16 %v380, %v378
      %v411 = vpack.c.b16 %v383, %v381
      %v412 = vpack.c.b16 %v384, %v382
      %v413 = vpack.c.b16 %v387, %v385
      %v414 = vpack.c.b16 %v388, %v386
      %v415 = vpack.c.b16 %v391, %v389
      %v416 = vpack.c.b16 %v392, %v390
      %v417 = vpack.c.b16 %v395, %v393
      %v418 = vpack.c.b16 %v396, %v394
      %v419 = vpack.c.b16 %v399, %v397
      %v420 = vpack.c.b16 %v400, %v398
      %v421 = vpack.c.b16 %v403, %v401
      %v422 = vpack.c.b16 %v404, %v402
      %v423 = vpack.c.b16 %v407, %v405
      %v424 = vpack.c.b16 %v408, %v406
      %v473 = vunpack.c.l.b16 %v329
      %v474 = vunpack.c.l.b16 %v330
      %v475 = vunpack.c.l.b16 %v331
      %v476 = vunpack.c.l.b16 %v332
      %v477 = vunpack.c.l.b16 %v333
      %v478 = vunpack.c.l.b16 %v334
      %v479 = vunpack.c.l.b16 %v335
      %v480 = vunpack.c.l.b16 %v336
      %v481 = vunpack.c.l.b16 %v337
      %v482 = vunpack.c.l.b16 %v338
      %v483 = vunpack.c.l.b16 %v339
      %v484 = vunpack.c.l.b16 %v340
      %v485 = vunpack.c.l.b16 %v341
      %v486 = vunpack.c.l.b16 %v342
      %v487 = vunpack.c.l.b16 %v343
      %v488 = vunpack.c.l.b16 %v344
      %v489 = vunpack.c.l.b16 %v345
      %v490 = vunpack.c.l.b16 %v346
      %v491 = vunpack.c.l.b16 %v347
      %v492 = vunpack.c.l.b16 %v348
      %v493 = vunpack.c.l.b16 %v349
      %v494 = vunpack.c.l.b16 %v350
      %v495 = vunpack.c.l.b16 %v351
      %v496 = vunpack.c.l.b16 %v352
      %v497 = vunpack.c.l.b16 %v353
      %v498 = vunpack.c.l.b16 %v354
      %v499 = vunpack.c.l.b16 %v355
      %v500 = vunpack.c.l.b16 %v356
      %v501 = vunpack.c.l.b16 %v357
      %v502 = vunpack.c.l.b16 %v358
      %v503 = vunpack.c.l.b16 %v359
      %v504 = vunpack.c.l.b16 %v360
      %v505 = vpack.c.b16 %v474, %v473
      %v506 = vpack.c.b16 %v476, %v475
      %v507 = vpack.c.b16 %v478, %v477
      %v508 = vpack.c.b16 %v480, %v479
      %v509 = vpack.c.b16 %v482, %v481
      %v510 = vpack.c.b16 %v484, %v483
      %v511 = vpack.c.b16 %v486, %v485
      %v512 = vpack.c.b16 %v488, %v487
      %v513 = vpack.c.b16 %v490, %v489
      %v514 = vpack.c.b16 %v492, %v491
      %v515 = vpack.c.b16 %v494, %v493
      %v516 = vpack.c.b16 %v496, %v495
      %v517 = vpack.c.b16 %v498, %v497
      %v518 = vpack.c.b16 %v500, %v499
      %v519 = vpack.c.b16 %v502, %v501
      %v520 = vpack.c.b16 %v504, %v503
      %537 = vmatprep.subr.bf16.mxu0 0
      %538 = vmatpush1.bf16.msra.mxu0 %v505
      %539 = vmatprep.subr.bf16.mxu0 0
      %540 = vmatpush1.bf16.msra.mxu0 %v506
      %541 = vmatprep.subr.bf16.mxu0 0
      %542 = vmatpush1.bf16.msra.mxu0 %v507
      %543 = vmatprep.subr.bf16.mxu0 0
      %544 = vmatpush1.bf16.msra.mxu0 %v508
      %545 = vmatprep.subr.bf16.mxu0 0
      %546 = vmatpush1.bf16.msra.mxu0 %v509
      %547 = vmatprep.subr.bf16.mxu0 0
      %548 = vmatpush1.bf16.msra.mxu0 %v510
      %549 = vmatprep.subr.bf16.mxu0 0
      %550 = vmatpush1.bf16.msra.mxu0 %v511
      %551 = vmatprep.subr.bf16.mxu0 0
      %552 = vmatpush1.bf16.msra.mxu0 %v512
      %553 = vmatprep.subr.bf16.mxu0 0
      %554 = vmatpush1.bf16.msra.mxu0 %v513
      %555 = vmatprep.subr.bf16.mxu0 0
      %556 = vmatpush1.bf16.msra.mxu0 %v514
      %557 = vmatprep.subr.bf16.mxu0 0
      %558 = vmatpush1.bf16.msra.mxu0 %v515
      %559 = vmatprep.subr.bf16.mxu0 0
      %560 = vmatpush1.bf16.msra.mxu0 %v516
      %561 = vmatprep.subr.bf16.mxu0 0
      %562 = vmatpush1.bf16.msra.mxu0 %v517
      %563 = vmatprep.subr.bf16.mxu0 0
      %564 = vmatpush1.bf16.msra.mxu0 %v518
      %565 = vmatprep.subr.bf16.mxu0 0
      %566 = vmatpush1.bf16.msra.mxu0 %v519
      %567 = vmatprep.subr.bf16.mxu0 0
      %568 = vmatpush1.bf16.msra.mxu0 %v520
      %569 = vmatprep.mubr.bf16.mxu0 %v410
      %570 = vmatmul.mubr.bf16.gmra.mrb[0].mxu0 %v409
      %v571 = vpop.f32.mrb[0].mxu0
      %v572 = vadd.f32 0.0, %v571
      %v573 = vpop.f32.mrb[0].mxu0
      %v574 = vpop.f32.mrb[0].mxu0
      %v575 = vadd.f32 0.0, %v574
      %v576 = vpop.f32.mrb[0].mxu0
      %577 = vmatprep.mubr.bf16.mxu0 %v412
      %578 = vmatmul.mubr.bf16.gmra.mrb[0].mxu0 %v411
      %v579 = vpop.f32.mrb[0].mxu0
      %v580 = vadd.f32 0.0, %v579
      %v581 = vpop.f32.mrb[0].mxu0
      %v582 = vpop.f32.mrb[0].mxu0
      %v583 = vadd.f32 0.0, %v582
      %v584 = vpop.f32.mrb[0].mxu0
      %585 = vmatprep.mubr.bf16.mxu0 %v414
      %586 = vmatmul.mubr.bf16.gmra.mrb[0].mxu0 %v413
      %v587 = vpop.f32.mrb[0].mxu0
      %v588 = vadd.f32 0.0, %v587
      %v589 = vpop.f32.mrb[0].mxu0
      %v590 = vpop.f32.mrb[0].mxu0
      %v591 = vadd.f32 0.0, %v590
      %v592 = vpop.f32.mrb[0].mxu0
      %593 = vmatprep.mubr.bf16.mxu0 %v416
      %594 = vmatmul.mubr.bf16.gmra.mrb[0].mxu0 %v415
      %v595 = vpop.f32.mrb[0].mxu0
      %v596 = vadd.f32 0.0, %v595
      %v597 = vpop.f32.mrb[0].mxu0
      %v598 = vpop.f32.mrb[0].mxu0
      %v599 = vadd.f32 0.0, %v598
      %v600 = vpop.f32.mrb[0].mxu0
      %601 = vmatprep.mubr.bf16.mxu0 %v418
      %602 = vmatmul.mubr.bf16.gmra.mrb[0].mxu0 %v417
      %v603 = vpop.f32.mrb[0].mxu0
      %v604 = vadd.f32 0.0, %v603
      %v605 = vpop.f32.mrb[0].mxu0
      %v606 = vpop.f32.mrb[0].mxu0
      %v607 = vadd.f32 0.0, %v606
      %v608 = vpop.f32.mrb[0].mxu0
      %609 = vmatprep.mubr.bf16.mxu0 %v420
      %610 = vmatmul.mubr.bf16.gmra.mrb[0].mxu0 %v419
      %v611 = vpop.f32.mrb[0].mxu0
      %v612 = vadd.f32 0.0, %v611
      %v613 = vpop.f32.mrb[0].mxu0
      %v614 = vpop.f32.mrb[0].mxu0
      %v615 = vadd.f32 0.0, %v614
      %v616 = vpop.f32.mrb[0].mxu0
      %617 = vmatprep.mubr.bf16.mxu0 %v422
      %618 = vmatmul.mubr.bf16.gmra.mrb[0].mxu0 %v421
      %v619 = vpop.f32.mrb[0].mxu0
      %v620 = vadd.f32 0.0, %v619
      %v621 = vpop.f32.mrb[0].mxu0
      %v622 = vpop.f32.mrb[0].mxu0
      %v623 = vadd.f32 0.0, %v622
      %v624 = vpop.f32.mrb[0].mxu0
      %625 = vmatprep.mubr.bf16.mxu0 %v424
      %626 = vmatmul.mubr.bf16.gmra.mrb[0].mxu0 %v423
      %v627 = vpop.f32.mrb[0].mxu0
      %v628 = vadd.f32 0.0, %v627
      %v629 = vpop.f32.mrb[0].mxu0
      %v630 = vpop.f32.mrb[0].mxu0
      %v631 = vadd.f32 0.0, %v630
      %v632 = vpop.f32.mrb[0].mxu0
      %633 = vdwg.mxu0
      %v634 = vadd.f32 %v297, %v572
      %v635 = vadd.f32 %v298, %v575
      %v636 = vadd.f32 %v299, %v580
      %v637 = vadd.f32 %v300, %v583
      %v638 = vadd.f32 %v301, %v588
      %v639 = vadd.f32 %v302, %v591
      %v640 = vadd.f32 %v303, %v596
      %v641 = vadd.f32 %v304, %v599
      %v642 = vadd.f32 %v305, %v604
      %v643 = vadd.f32 %v306, %v607
      %v644 = vadd.f32 %v307, %v612
      %v645 = vadd.f32 %v308, %v615
      %v646 = vadd.f32 %v309, %v620
      %v647 = vadd.f32 %v310, %v623
      %v648 = vadd.f32 %v311, %v628
      %v649 = vadd.f32 %v312, %v631
      %650 = vst [vmem:[#allocation2] sm:$0xff] %v634
      %651 = vst [vmem:[#allocation2 + $0x8] sm:$0xff] %v635
      %652 = vst [vmem:[#allocation2 + $0x10] sm:$0xff] %v636
      %653 = vst [vmem:[#allocation2 + $0x18] sm:$0xff] %v637
      %654 = vst [vmem:[#allocation2 + $0x20] sm:$0xff] %v638
      %655 = vst [vmem:[#allocation2 + $0x28] sm:$0xff] %v639
      %656 = vst [vmem:[#allocation2 + $0x30] sm:$0xff] %v640
      %657 = vst [vmem:[#allocation2 + $0x38] sm:$0xff] %v641
      %658 = vst [vmem:[#allocation2 + $0x40] sm:$0xff] %v642
      %659 = vst [vmem:[#allocation2 + $0x48] sm:$0xff] %v643
      %660 = vst [vmem:[#allocation2 + $0x50] sm:$0xff] %v644
      %661 = vst [vmem:[#allocation2 + $0x58] sm:$0xff] %v645
      %662 = vst [vmem:[#allocation2 + $0x60] sm:$0xff] %v646
      %663 = vst [vmem:[#allocation2 + $0x68] sm:$0xff] %v647
      %664 = vst [vmem:[#allocation2 + $0x70] sm:$0xff] %v648
      %665 = vst [vmem:[#allocation2 + $0x78] sm:$0xff] %v649
      // Predicated region
      $region41: #{gcn_forward_pallas.7} parent=35 // pred_check
        %p666 = pneg %p277
      $region42: #{gcn_forward_pallas.7} parent=35 // pred_check_branch
        %668 = sbr.rel (%p666) target = $region44
      $region43: #{gcn_forward_pallas.7} parent=35 // pred_region
        %v669 = vld [vmem:[#allocation2] sm:$0xff]
        %v670 = vld [vmem:[#allocation2 + $0x8] sm:$0xff]
        %v671 = vld [vmem:[#allocation2 + $0x10] sm:$0xff]
        %v672 = vld [vmem:[#allocation2 + $0x18] sm:$0xff]
        %v673 = vld [vmem:[#allocation2 + $0x20] sm:$0xff]
        %v674 = vld [vmem:[#allocation2 + $0x28] sm:$0xff]
        %v675 = vld [vmem:[#allocation2 + $0x30] sm:$0xff]
        %v676 = vld [vmem:[#allocation2 + $0x38] sm:$0xff]
        %v677 = vld [vmem:[#allocation2 + $0x40] sm:$0xff]
        %v678 = vld [vmem:[#allocation2 + $0x48] sm:$0xff]
        %v679 = vld [vmem:[#allocation2 + $0x50] sm:$0xff]
        %v680 = vld [vmem:[#allocation2 + $0x58] sm:$0xff]
        %v681 = vld [vmem:[#allocation2 + $0x60] sm:$0xff]
        %v682 = vld [vmem:[#allocation2 + $0x68] sm:$0xff]
        %v683 = vld [vmem:[#allocation2 + $0x70] sm:$0xff]
        %v684 = vld [vmem:[#allocation2 + $0x78] sm:$0xff]
        %v685 = vld [vmem:[%s268] sm:$0xff]
        %v686 = vld [vmem:[%s268 + $0x8] sm:$0xff]
        %v687 = vld [vmem:[%s268 + $0x10] sm:$0xff]
        %v688 = vld [vmem:[%s268 + $0x18] sm:$0xff]
        %v689 = vld [vmem:[%s268 + $0x20] sm:$0xff]
        %v690 = vld [vmem:[%s268 + $0x28] sm:$0xff]
        %v691 = vld [vmem:[%s268 + $0x30] sm:$0xff]
        %v692 = vld [vmem:[%s268 + $0x38] sm:$0xff]
        %v693 = vld [vmem:[%s268 + $0x40] sm:$0xff]
        %v694 = vld [vmem:[%s268 + $0x48] sm:$0xff]
        %v695 = vld [vmem:[%s268 + $0x50] sm:$0xff]
        %v696 = vld [vmem:[%s268 + $0x58] sm:$0xff]
        %v697 = vld [vmem:[%s268 + $0x60] sm:$0xff]
        %v698 = vld [vmem:[%s268 + $0x68] sm:$0xff]
        %v699 = vld [vmem:[%s268 + $0x70] sm:$0xff]
        %v700 = vld [vmem:[%s268 + $0x78] sm:$0xff]
        %v701 = vld [vmem:[%s3] sm:$0x1]
        %703 = vset.pattern.permute.xlu0 0
        %704 = vperm.xlu0 %703, %v685
        %v705 = vpop.permute.xlu0 %704
        %708 = vset.pattern.permute.xlu0 0
        %709 = vperm.xlu0 %708, %v686
        %v710 = vpop.permute.xlu0 %709
        %713 = vset.pattern.permute.xlu0 0
        %714 = vperm.xlu0 %713, %v687
        %v715 = vpop.permute.xlu0 %714
        %718 = vset.pattern.permute.xlu0 0
        %719 = vperm.xlu0 %718, %v688
        %v720 = vpop.permute.xlu0 %719
        %723 = vset.pattern.permute.xlu0 0
        %724 = vperm.xlu0 %723, %v689
        %v725 = vpop.permute.xlu0 %724
        %728 = vset.pattern.permute.xlu0 0
        %729 = vperm.xlu0 %728, %v690
        %v730 = vpop.permute.xlu0 %729
        %733 = vset.pattern.permute.xlu0 0
        %734 = vperm.xlu0 %733, %v691
        %v735 = vpop.permute.xlu0 %734
        %738 = vset.pattern.permute.xlu0 0
        %739 = vperm.xlu0 %738, %v692
        %v740 = vpop.permute.xlu0 %739
        %743 = vset.pattern.permute.xlu0 0
        %744 = vperm.xlu0 %743, %v693
        %v745 = vpop.permute.xlu0 %744
        %748 = vset.pattern.permute.xlu0 0
        %749 = vperm.xlu0 %748, %v694
        %v750 = vpop.permute.xlu0 %749
        %753 = vset.pattern.permute.xlu0 0
        %754 = vperm.xlu0 %753, %v695
        %v755 = vpop.permute.xlu0 %754
        %758 = vset.pattern.permute.xlu0 0
        %759 = vperm.xlu0 %758, %v696
        %v760 = vpop.permute.xlu0 %759
        %763 = vset.pattern.permute.xlu0 0
        %764 = vperm.xlu0 %763, %v697
        %v765 = vpop.permute.xlu0 %764
        %768 = vset.pattern.permute.xlu0 0
        %769 = vperm.xlu0 %768, %v698
        %v770 = vpop.permute.xlu0 %769
        %773 = vset.pattern.permute.xlu0 0
        %774 = vperm.xlu0 %773, %v699
        %v775 = vpop.permute.xlu0 %774
        %778 = vset.pattern.permute.xlu0 0
        %779 = vperm.xlu0 %778, %v700
        %v780 = vpop.permute.xlu0 %779
        %v783 = vlaneseq
        %v784 = vshrl.u32 %v783, 7
        %v785 = vsub.s32 0, %v784
        %v786 = vrot.slane %v701, %v785
        %v788 = vmul.f32 %v705, %v786
        %v789 = vmul.f32 %v710, %v786
        %v790 = vmul.f32 %v715, %v786
        %v791 = vmul.f32 %v720, %v786
        %v792 = vmul.f32 %v725, %v786
        %v793 = vmul.f32 %v730, %v786
        %v794 = vmul.f32 %v735, %v786
        %v795 = vmul.f32 %v740, %v786
        %v796 = vmul.f32 %v745, %v786
        %v797 = vmul.f32 %v750, %v786
        %v798 = vmul.f32 %v755, %v786
        %v799 = vmul.f32 %v760, %v786
        %v800 = vmul.f32 %v765, %v786
        %v801 = vmul.f32 %v770, %v786
        %v802 = vmul.f32 %v775, %v786
        %v803 = vmul.f32 %v780, %v786
        %v804 = vadd.f32 %v669, %v788
        %v805 = vadd.f32 %v670, %v789
        %v806 = vadd.f32 %v671, %v790
        %v807 = vadd.f32 %v672, %v791
        %v808 = vadd.f32 %v673, %v792
        %v809 = vadd.f32 %v674, %v793
        %v810 = vadd.f32 %v675, %v794
        %v811 = vadd.f32 %v676, %v795
        %v812 = vadd.f32 %v677, %v796
        %v813 = vadd.f32 %v678, %v797
        %v814 = vadd.f32 %v679, %v798
        %v815 = vadd.f32 %v680, %v799
        %v816 = vadd.f32 %v681, %v800
        %v817 = vadd.f32 %v682, %v801
        %v818 = vadd.f32 %v683, %v802
        %v819 = vadd.f32 %v684, %v803
        %v820 = vlaneseq
        %v821 = vand.u32 %v820, 127
        %vm822 = vcmp.lt.s32.totalorder %v821, 4
        %v823 = vsel %vm822, %v804, -1e+30
        %v824 = vsel %vm822, %v805, -1e+30
        %v825 = vsel %vm822, %v806, -1e+30
        %v826 = vsel %vm822, %v807, -1e+30
        %v827 = vsel %vm822, %v808, -1e+30
        %v828 = vsel %vm822, %v809, -1e+30
        %v829 = vsel %vm822, %v810, -1e+30
        %v830 = vsel %vm822, %v811, -1e+30
        %v831 = vsel %vm822, %v812, -1e+30
        %v832 = vsel %vm822, %v813, -1e+30
        %v833 = vsel %vm822, %v814, -1e+30
        %v834 = vsel %vm822, %v815, -1e+30
        %v835 = vsel %vm822, %v816, -1e+30
        %v836 = vsel %vm822, %v817, -1e+30
        %v837 = vsel %vm822, %v818, -1e+30
        %v838 = vsel %vm822, %v819, -1e+30
        %839 = vmax.xlane.f32.xlu0 %v823
        %v840 = vpop.xlane.xlu0 %839
        %841 = vmax.xlane.f32.xlu0 %v824
        %v842 = vpop.xlane.xlu0 %841
        %843 = vmax.xlane.f32.xlu0 %v825
        %v844 = vpop.xlane.xlu0 %843
        %845 = vmax.xlane.f32.xlu0 %v826
        %v846 = vpop.xlane.xlu0 %845
        %847 = vmax.xlane.f32.xlu0 %v827
        %v848 = vpop.xlane.xlu0 %847
        %849 = vmax.xlane.f32.xlu0 %v828
        %v850 = vpop.xlane.xlu0 %849
        %851 = vmax.xlane.f32.xlu0 %v829
        %v852 = vpop.xlane.xlu0 %851
        %853 = vmax.xlane.f32.xlu0 %v830
        %v854 = vpop.xlane.xlu0 %853
        %855 = vmax.xlane.f32.xlu0 %v831
        %v856 = vpop.xlane.xlu0 %855
        %857 = vmax.xlane.f32.xlu0 %v832
        %v858 = vpop.xlane.xlu0 %857
        %859 = vmax.xlane.f32.xlu0 %v833
        %v860 = vpop.xlane.xlu0 %859
        %861 = vmax.xlane.f32.xlu0 %v834
        %v862 = vpop.xlane.xlu0 %861
        %863 = vmax.xlane.f32.xlu0 %v835
        %v864 = vpop.xlane.xlu0 %863
        %865 = vmax.xlane.f32.xlu0 %v836
        %v866 = vpop.xlane.xlu0 %865
        %867 = vmax.xlane.f32.xlu0 %v837
        %v868 = vpop.xlane.xlu0 %867
        %869 = vmax.xlane.f32.xlu0 %v838
        %v870 = vpop.xlane.xlu0 %869
        %v871 = vsub.f32 %v823, %v840
        %v872 = vsub.f32 %v824, %v842
        %v873 = vsub.f32 %v825, %v844
        %v874 = vsub.f32 %v826, %v846
        %v875 = vsub.f32 %v827, %v848
        %v876 = vsub.f32 %v828, %v850
        %v877 = vsub.f32 %v829, %v852
        %v878 = vsub.f32 %v830, %v854
        %v879 = vsub.f32 %v831, %v856
        %v880 = vsub.f32 %v832, %v858
        %v881 = vsub.f32 %v833, %v860
        %v882 = vsub.f32 %v834, %v862
        %v883 = vsub.f32 %v835, %v864
        %v884 = vsub.f32 %v836, %v866
        %v885 = vsub.f32 %v837, %v868
        %v886 = vsub.f32 %v838, %v870
        %v887 = vmul.f32 %v871, 1.442695
        %v888 = vpow.pop %v887
        %v889 = vmul.f32 %v872, 1.442695
        %v890 = vpow.pop %v889
        %v891 = vmul.f32 %v873, 1.442695
        %v892 = vpow.pop %v891
        %v893 = vmul.f32 %v874, 1.442695
        %v894 = vpow.pop %v893
        %v895 = vmul.f32 %v875, 1.442695
        %v896 = vpow.pop %v895
        %v897 = vmul.f32 %v876, 1.442695
        %v898 = vpow.pop %v897
        %v899 = vmul.f32 %v877, 1.442695
        %v900 = vpow.pop %v899
        %v901 = vmul.f32 %v878, 1.442695
        %v902 = vpow.pop %v901
        %v903 = vmul.f32 %v879, 1.442695
        %v904 = vpow.pop %v903
        %v905 = vmul.f32 %v880, 1.442695
        %v906 = vpow.pop %v905
        %v907 = vmul.f32 %v881, 1.442695
        %v908 = vpow.pop %v907
        %v909 = vmul.f32 %v882, 1.442695
        %v910 = vpow.pop %v909
        %v911 = vmul.f32 %v883, 1.442695
        %v912 = vpow.pop %v911
        %v913 = vmul.f32 %v884, 1.442695
        %v914 = vpow.pop %v913
        %v915 = vmul.f32 %v885, 1.442695
        %v916 = vpow.pop %v915
        %v917 = vmul.f32 %v886, 1.442695
        %v918 = vpow.pop %v917
        %919 = vadd.xlane.f32.xlu0 %v888
        %v920 = vpop.xlane.xlu0 %919
        %921 = vadd.xlane.f32.xlu0 %v890
        %v922 = vpop.xlane.xlu0 %921
        %923 = vadd.xlane.f32.xlu0 %v892
        %v924 = vpop.xlane.xlu0 %923
        %925 = vadd.xlane.f32.xlu0 %v894
        %v926 = vpop.xlane.xlu0 %925
        %927 = vadd.xlane.f32.xlu0 %v896
        %v928 = vpop.xlane.xlu0 %927
        %929 = vadd.xlane.f32.xlu0 %v898
        %v930 = vpop.xlane.xlu0 %929
        %931 = vadd.xlane.f32.xlu0 %v900
        %v932 = vpop.xlane.xlu0 %931
        %933 = vadd.xlane.f32.xlu0 %v902
        %v934 = vpop.xlane.xlu0 %933
        %935 = vadd.xlane.f32.xlu0 %v904
        %v936 = vpop.xlane.xlu0 %935
        %937 = vadd.xlane.f32.xlu0 %v906
        %v938 = vpop.xlane.xlu0 %937
        %939 = vadd.xlane.f32.xlu0 %v908
        %v940 = vpop.xlane.xlu0 %939
        %941 = vadd.xlane.f32.xlu0 %v910
        %v942 = vpop.xlane.xlu0 %941
        %943 = vadd.xlane.f32.xlu0 %v912
        %v944 = vpop.xlane.xlu0 %943
        %945 = vadd.xlane.f32.xlu0 %v914
        %v946 = vpop.xlane.xlu0 %945
        %947 = vadd.xlane.f32.xlu0 %v916
        %v948 = vpop.xlane.xlu0 %947
        %949 = vadd.xlane.f32.xlu0 %v918
        %v950 = vpop.xlane.xlu0 %949
        %v951 = vlog2.pop %v920
        %v952 = vmul.f32 %v951, 0.6931472
        %v953 = vlog2.pop %v922
        %v954 = vmul.f32 %v953, 0.6931472
        %v955 = vlog2.pop %v924
        %v956 = vmul.f32 %v955, 0.6931472
        %v957 = vlog2.pop %v926
        %v958 = vmul.f32 %v957, 0.6931472
        %v959 = vlog2.pop %v928
        %v960 = vmul.f32 %v959, 0.6931472
        %v961 = vlog2.pop %v930
        %v962 = vmul.f32 %v961, 0.6931472
        %v963 = vlog2.pop %v932
        %v964 = vmul.f32 %v963, 0.6931472
        %v965 = vlog2.pop %v934
        %v966 = vmul.f32 %v965, 0.6931472
        %v967 = vlog2.pop %v936
        %v968 = vmul.f32 %v967, 0.6931472
        %v969 = vlog2.pop %v938
        %v970 = vmul.f32 %v969, 0.6931472
        %v971 = vlog2.pop %v940
        %v972 = vmul.f32 %v971, 0.6931472
        %v973 = vlog2.pop %v942
        %v974 = vmul.f32 %v973, 0.6931472
        %v975 = vlog2.pop %v944
        %v976 = vmul.f32 %v975, 0.6931472
        %v977 = vlog2.pop %v946
        %v978 = vmul.f32 %v977, 0.6931472
        %v979 = vlog2.pop %v948
        %v980 = vmul.f32 %v979, 0.6931472
        %v981 = vlog2.pop %v950
        %v982 = vmul.f32 %v981, 0.6931472
        %v983 = vsub.f32 %v871, %v952
        %v984 = vsub.f32 %v872, %v954
        %v985 = vsub.f32 %v873, %v956
        %v986 = vsub.f32 %v874, %v958
        %v987 = vsub.f32 %v875, %v960
        %v988 = vsub.f32 %v876, %v962
        %v989 = vsub.f32 %v877, %v964
        %v990 = vsub.f32 %v878, %v966
        %v991 = vsub.f32 %v879, %v968
        %v992 = vsub.f32 %v880, %v970
        %v993 = vsub.f32 %v881, %v972
        %v994 = vsub.f32 %v882, %v974
        %v995 = vsub.f32 %v883, %v976
        %v996 = vsub.f32 %v884, %v978
        %v997 = vsub.f32 %v885, %v980
        %v998 = vsub.f32 %v886, %v982
        %999 = vst [vmem:[%s274] sm:$0xff] %v983
        %1000 = vst [vmem:[%s274 + $0x8] sm:$0xff] %v984
        %1001 = vst [vmem:[%s274 + $0x10] sm:$0xff] %v985
        %1002 = vst [vmem:[%s274 + $0x18] sm:$0xff] %v986
        %1003 = vst [vmem:[%s274 + $0x20] sm:$0xff] %v987
        %1004 = vst [vmem:[%s274 + $0x28] sm:$0xff] %v988
        %1005 = vst [vmem:[%s274 + $0x30] sm:$0xff] %v989
        %1006 = vst [vmem:[%s274 + $0x38] sm:$0xff] %v990
        %1007 = vst [vmem:[%s274 + $0x40] sm:$0xff] %v991
        %1008 = vst [vmem:[%s274 + $0x48] sm:$0xff] %v992
        %1009 = vst [vmem:[%s274 + $0x50] sm:$0xff] %v993
        %1010 = vst [vmem:[%s274 + $0x58] sm:$0xff] %v994
        %1011 = vst [vmem:[%s274 + $0x60] sm:$0xff] %v995
        %1012 = vst [vmem:[%s274 + $0x68] sm:$0xff] %v996
        %1013 = vst [vmem:[%s274 + $0x70] sm:$0xff] %v997
        %1014 = vst [vmem:[%s274 + $0x78] sm:$0xff] %v998
      $region44: #{gcn_forward_pallas.7} parent=35 // pred_fallthru
        _
      %s1015 = smul.u32 16, %s19
      %p1016 = scmp.lt.s32.totalorder %s1015, 31
      %s1017 = scalar_select %p1016, %s1015, 31
      %s1018 = smul.addr %s1017, 8
      %s1019 = scalar_lea.vmem %s4, %s1018
      // Predicated region
      $region45: #{gcn_forward_pallas.7} parent=35 // pred_check
        %p1020 = pneg %p146
      $region46: #{gcn_forward_pallas.7} parent=35 // pred_check_branch
        %1022 = sbr.rel (%p1020) target = $region48
      $region47: #{gcn_forward_pallas.7} parent=35 // pred_region
        %s1023 = smul.u32 16, %s19
      $region48: #{gcn_forward_pallas.7} parent=35 // pred_fallthru
        _
    $region36: #{gcn_forward_pallas.7} parent=5 // pred_fallthru
      _
    %p1024 = scmp.le.s32.totalorder 2, %s10
    // Predicated region
    $region49: #{gcn_forward_pallas.7} parent=5 // pred_check
      %p1025 = pneg %p1024
    $region50: #{gcn_forward_pallas.7} parent=5 // pred_check_branch
      %1027 = sbr.rel (%p1025) target = $region52
    $region51: #{gcn_forward_pallas.7} parent=5 // pred_region
      %s1028 = ssub.s32 %s10, 2
      // Predicated region
      $region53: #{gcn_forward_pallas.7} parent=51 // pred_check
        %p1029 = pneg %p152
      $region54: #{gcn_forward_pallas.7} parent=51 // pred_check_branch
        %1031 = sbr.rel (%p1029) target = $region56
      $region55: #{gcn_forward_pallas.7} parent=51 // pred_region
        %s1032 = smul.u32 16, %s21
        %p1033 = scmp.lt.s32.totalorder %s1032, 31
        %s1034 = scalar_select %p1033, %s1032, 31
        %s1035 = smul.addr %s1034, 8
        %s1036 = scalar_lea.vmem %s4, %s1035
      $region56: #{gcn_forward_pallas.7} parent=51 // pred_fallthru
        _
    $region52: #{gcn_forward_pallas.7} parent=5 // pred_fallthru
      _
  $region6: #{gcn_forward_pallas.7} parent=0 // loop_footer
    %s14 = sadd.s32 1, %s10
  $region7: #{gcn_forward_pallas.7} parent=0 // loop_footer_branch
    %9 = sbr.rel target = $region3
  $region8: #{gcn_forward_pallas.7} parent=0 // loop_exit
    _

</llo_original>
